<compile_context>
chip_gen: v7x
topology: tpu7x:2x2x1
jax: 0.10.0
libtpu: 0.0.40
codegen_flags: <defaults>
</compile_context>

<pallas_src>
import math

import jax
import jax.numpy as jnp
from jax.experimental import pallas as pl
from jax.experimental.pallas import tpu as pltpu


def _round_up(x, m):
    return (x + m - 1) // m * m


def _sublane_multiple(dtype):
    # f32 -> 8, bf16 -> 16, int8/fp8 -> 32 (second-to-last dim tiling).
    itemsize = jnp.dtype(dtype).itemsize
    return 8 * max(1, 4 // itemsize)


def _linear_kernel(x_ref, w_ref, b_ref, o_ref):
    # x_ref: (TM, K)  w_ref: (K, F)  b_ref: (1, F)  o_ref: (TM, F)
    acc = jnp.dot(x_ref[...], w_ref[...], preferred_element_type=jnp.float32)
    # f32 epilogue (bias add + cast) — portable across v5e/v6e/v7x.
    o_ref[...] = (acc + b_ref[...].astype(jnp.float32)).astype(o_ref.dtype)


def pallas_linear(x, w, b, *, tile_m=1024, use_pallas=None):
    """y = x @ w + b with a row-tiled Pallas kernel (no wrapper padding).

    x: (N, K) row-major, w: (K, F) (already transposed vs. torch storage),
    b: (F,) or (1, F).
    use_pallas: None -> work-based auto choice, True/False -> force.
    """
    n, k = x.shape
    f = w.shape[1]
    out_dtype = x.dtype
    if b.ndim == 1:
        b = b.reshape(1, f)

    itemsize = jnp.dtype(x.dtype).itemsize
    bytes_accessed = (n * k + k * f + f + n * f) * itemsize
    flops = 2 * n * k * f

    if use_pallas is None:
        # Work-based threshold: tiny problems are launch-overhead dominated;
        # let XLA fuse them.
        use_pallas = (bytes_accessed >= (1 << 20)) or (flops >= 10_000_000)

    if not use_pallas:
        # Match the Pallas path numerics (f32 accumulation, f32 bias add).
        acc = jnp.dot(x, w, preferred_element_type=jnp.float32)
        return (acc + b.astype(jnp.float32)).astype(out_dtype)

    sub = _sublane_multiple(x.dtype)
    # Balance the parallel row grid across v7x's 2 TensorCores: no tile
    # larger than ~half the rows (rounded to the sublane granularity).
    tm = min(int(tile_m), _round_up(pl.cdiv(n, 2), sub))
    tm = max(sub, _round_up(tm, sub))
    grid = (pl.cdiv(n, tm),)

    return pl.pallas_call(
        _linear_kernel,
        out_shape=jax.ShapeDtypeStruct((n, f), out_dtype),
        grid_spec=pltpu.PrefetchScalarGridSpec(
            num_scalar_prefetch=0,
            grid=grid,
            in_specs=[
                # Streamed row tiles of x; K axis equals the full array dim.
                pl.BlockSpec((tm, k), lambda i: (i, 0)),
                # Weight and bias stay resident in VMEM across the grid.
                pl.BlockSpec((k, f), lambda i: (0, 0)),
                pl.BlockSpec((1, f), lambda i: (0, 0)),
            ],
            # Natural (N, F) output; Pallas masks the partial last row tile.
            out_specs=pl.BlockSpec((tm, f), lambda i: (i, 0)),
        ),
        compiler_params=pltpu.CompilerParams(
            # Independent row tiles -> shard across both TCs on v7x.
            dimension_semantics=("parallel",),
            # Double-buffered tiles here total well under a MiB; 32 MiB is
            # safe on every generation (v7x scoped default is 32 MiB).
            vmem_limit_bytes=32 * 1024 * 1024,
        ),
        cost_estimate=pl.CostEstimate(
            flops=flops, transcendentals=0, bytes_accessed=bytes_accessed
        ),
    )(x, w, b)


def init_mlp_params(key, in_nf, out_nf, n_layers, dtype=jnp.float32):
    """Deterministic init mirroring nn.Linear's default (Kaiming-uniform-ish).

    Prep is hoisted here (not the hot path): W stored as (fan_in, fan_out)
    (transposed vs. PyTorch's (out, in)), b stored as (1, fan_out).
    For bf16 streaming on v6e/v7x, pass dtype=jnp.bfloat16 here once; the
    kernel still accumulates in f32.
    """
    h_nf = in_nf
    dims = []
    for layer in range(n_layers):
        if layer == 0:
            dims.append((in_nf, h_nf))
        else:
            dims.append((h_nf, h_nf))
    dims.append((h_nf, out_nf))  # final projection (the only live layer)

    params = []
    for fan_in, fan_out in dims:
        key, kw, kb = jax.random.split(key, 3)
        bound = 1.0 / math.sqrt(fan_in)
        w = jax.random.uniform(kw, (fan_in, fan_out), dtype, -bound, bound)
        b = jax.random.uniform(kb, (1, fan_out), dtype, -bound, bound)
        params.append((w, b))
    return params


def mlp_forward(node_feats, params, use_pallas=None):
    """Exact reproduction of the PyTorch forward: every layer is applied to
    the original input and only the last result is returned, so only the
    final Linear contributes (hidden layers / activations are dead code)."""
    w_last, b_last = params[-1]
    return pallas_linear(node_feats, w_last, b_last, use_pallas=use_pallas)


if __name__ == "__main__":
    key = jax.random.PRNGKey(0)
    k_in, k_par = jax.random.split(key)

    # GNN-ish sizes: 4100 nodes (NOT a multiple of the row tile -> exercises
    # the masked partial last tile), 64 input feats, 32 output feats.
    # This shape also clears the work-based Pallas threshold (~1.5 MiB moved);
    # use_pallas=True additionally guarantees the kernel path is exercised.
    N, IN_NF, OUT_NF, N_LAYERS = 4100, 64, 32, 2
    node_feats = jax.random.normal(k_in, (N, IN_NF), dtype=jnp.float32)
    params = init_mlp_params(k_par, IN_NF, OUT_NF, N_LAYERS)

    out = jax.block_until_ready(mlp_forward(node_feats, params, use_pallas=True))

    # Reference check in plain JAX (last Linear applied to the raw input).
    w_last, b_last = params[-1]
    ref = node_feats @ w_last + b_last
    assert out.shape == (N, OUT_NF)
    assert jnp.allclose(out, ref, atol=1e-5, rtol=1e-5)

    # Also sanity-check the tiny-problem XLA fallback path.
    small = node_feats[:12]
    small_out = jax.block_until_ready(mlp_forward(small, params))
    assert jnp.allclose(small_out, small @ w_last + b_last, atol=1e-5, rtol=1e-5)

    print("KERNEL_OK")
</pallas_src>

<mosaic_0001>
module attributes {stable_mosaic.version = 11 : i64} {
  func.func @_linear_kernel(%arg0: i32, %arg1: memref<1024x64xf32, #tpu.memory_space<vmem>>, %arg2: memref<64x32xf32, #tpu.memory_space<vmem>>, %arg3: memref<1x32xf32, #tpu.memory_space<vmem>>, %arg4: memref<1024x32xf32, #tpu.memory_space<vmem>>) attributes {dimension_semantics = [#tpu.dimension_semantics<parallel>], iteration_bounds = array<i64: 5>, scalar_prefetch = 0 : i64, scratch_operands = 0 : i64, tpu.core_type = #tpu.core_type<tc>, window_params = [{transform_indices = @transform_0, window_bounds = array<i64: 1024, 64>}, {pipeline_mode = #tpu.pipeline_mode<synchronous>, transform_indices = @transform_1, window_bounds = array<i64: 64, 32>}, {pipeline_mode = #tpu.pipeline_mode<synchronous>, transform_indices = @transform_2, window_bounds = array<i64: 1, 32>}, {transform_indices = @transform_3, window_bounds = array<i64: 1024, 32>}]} {
    %c0 = arith.constant 0 : index
    %c0_0 = arith.constant 0 : index
    %0 = vector.load %arg1[%c0, %c0_0] : memref<1024x64xf32, #tpu.memory_space<vmem>>, vector<1024x64xf32>
    %c0_1 = arith.constant 0 : index
    %c0_2 = arith.constant 0 : index
    %1 = vector.load %arg2[%c0_1, %c0_2] : memref<64x32xf32, #tpu.memory_space<vmem>>, vector<64x32xf32>
    %cst = arith.constant dense<0.000000e+00> : vector<1024x32xf32>
    %2 = tpu.matmul %0, %1, %cst {dimension_numbers = #tpu.dot_dimension_numbers<[1], [0], [0], [1], [0, 0, 1, 1], [], []>} : vector<1024x64xf32>, vector<64x32xf32>, vector<1024x32xf32> -> vector<1024x32xf32>
    %c0_3 = arith.constant 0 : index
    %c0_4 = arith.constant 0 : index
    %3 = vector.load %arg3[%c0_3, %c0_4] : memref<1x32xf32, #tpu.memory_space<vmem>>, vector<1x32xf32>
    %4 = vector.broadcast %3 : vector<1x32xf32> to vector<1024x32xf32>
    %5 = arith.addf %2, %4 : vector<1024x32xf32>
    %c0_5 = arith.constant 0 : index
    %c0_6 = arith.constant 0 : index
    %6 = vector.load %arg4[%c0_5, %c0_6] : memref<1024x32xf32, #tpu.memory_space<vmem>>, vector<1024x32xf32>
    tpu.vector_store %arg4[%c0_5, %c0_6], %5 {strides = array<i32>} : memref<1024x32xf32, #tpu.memory_space<vmem>>, vector<1024x32xf32>,
    return
  }
  func.func @transform_0(%arg0: i32) -> (i32, i32) {
    %c0_i32 = arith.constant 0 : i32
    %c0_i32_0 = arith.constant 0 : i32
    return %arg0, %c0_i32 : i32, i32
  }
  func.func @transform_1(%arg0: i32) -> (i32, i32) {
    %c0_i32 = arith.constant 0 : i32
    %c0_i32_0 = arith.constant 0 : i32
    %c0_i32_1 = arith.constant 0 : i32
    return %c0_i32, %c0_i32_0 : i32, i32
  }
  func.func @transform_2(%arg0: i32) -> (i32, i32) {
    %c0_i32 = arith.constant 0 : i32
    %c0_i32_0 = arith.constant 0 : i32
    %c0_i32_1 = arith.constant 0 : i32
    return %c0_i32, %c0_i32_0 : i32, i32
  }
  func.func @transform_3(%arg0: i32) -> (i32, i32) {
    %c0_i32 = arith.constant 0 : i32
    %c0_i32_0 = arith.constant 0 : i32
    return %arg0, %c0_i32 : i32, i32
  }
}

</mosaic_0001>

<llo_original>
// kernel: tpu_custom_call.1
$region0: #{tpu_custom_call.1}
  #allocation0 [shape = 'u32[]', space=smem, size = 0x4, offset = 0x4, fixed_abs, tag = 'smem constant byte address 0x4 - core index']
  #allocation1 [shape = 'u32[144,128]{1,0:T(1,128)}', space=vmem, size = 0x12000, scoped, tag = 'internal scratch']
  %s0 = inlined_call_operand.vmem [shape: f32[4100,64], index: 0, kind: input, shape index: {}]
  %s1 = inlined_call_operand.vmem [shape: f32[64,32], index: 1, kind: input, shape index: {}]
  %s2 = inlined_call_operand.vmem [shape: f32[1,32], index: 2, kind: input, shape index: {}]
  %s3 = inlined_call_operand.vmem [shape: f32[4100,32], index: 3, kind: output, shape index: {}]
  %s4 = sld [smem:[#allocation0]]
  $region93: #{tpu_custom_call.1} parent=0
    _
  %s6 = ssub.s32 1, %s4
  %s7 = scalar_select 0, %s6, %s4
  $region1: #{tpu_custom_call.1} parent=0
    #allocation2 [shape = 'u8[1048576]{0}', space=vmem, size = 0x100000, scoped, tag = 'output window, operand 0']
    loop: start=0, step=1, limit=7
    $region2: #{tpu_custom_call.1} parent=1 // loop_pre_header
      _
    $region3: #{tpu_custom_call.1} parent=1 // loop_header
      %s9 = sphi 0, %s13
      %p10 = scmp.ge.s32.totalorder %s9, 7
      %s19 = sphi 0, %s21
      %s22 = sphi 0, %s19
      %s23 = sphi 0, %s22
      %s39 = sphi 0, %s23
      %s43 = sphi 0, %s43
      %s45 = sphi 0, %s43
      %s46 = sphi 0, %s45
      %s60 = sphi 0, %s46
      %s64 = sphi 0, %s64
      %s66 = sphi 0, %s64
      %s67 = sphi 0, %s66
      %s81 = sphi 0, %s67
      %s87 = sphi 0, %s89
      %s90 = sphi 0, %s87
      %s91 = sphi 0, %s90
      %s107 = sphi 0, %s91
    $region4: #{tpu_custom_call.1} parent=1 // loop_header_branch
      %12 = sbr.rel (%p10) target = $region8
    $region5: #{tpu_custom_call.1} parent=1 // loop_body
      %s14 = ssub.s32 %s9, 1
      %s15 = ssub.s32 %s9, 2
      %s16 = sadd.s32 %s9, 1
      %s17 = ssub.s32 %s9, %s16
      %p18 = scmp.eq.s32.totalorder %s17, 0
      %s20 = sadd.s32 %s19, 1
      %s21 = scalar_select %p18, %s19, %s20
      %p24 = pneg %p18
      %p25 = scmp.eq.s32.totalorder %s9, 4
      %p26 = por %p24, %p25
      %p27 = scmp.ne.s32.totalorder %s19, %s22
      %p28 = scmp.eq.s32.totalorder %s9, 0
      %p29 = por %p27, %p28
      %p30 = scmp.ne.s32.totalorder %s19, %s22
      %p31 = scmp.eq.s32.totalorder %s14, 4
      %p32 = por %p30, %p31
      %p33 = scmp.ne.s32.totalorder %s22, %s23
      %p34 = scmp.eq.s32.totalorder %s14, 0
      %p35 = por %p33, %p34
      %p36 = scmp.ne.s32.totalorder %s22, %s23
      %p37 = scmp.eq.s32.totalorder %s15, 4
      %p38 = por %p36, %p37
      %p40 = scmp.ne.s32.totalorder %s23, %s39
      %p41 = scmp.eq.s32.totalorder %s15, 0
      %p42 = por %p40, %p41
      %s44 = sadd.s32 %s43, 1
      %p47 = scmp.eq.s32.totalorder %s9, 4
      %p48 = scmp.ne.s32.totalorder %s43, %s45
      %p49 = scmp.eq.s32.totalorder %s9, 0
      %p50 = por %p48, %p49
      %p51 = scmp.ne.s32.totalorder %s43, %s45
      %p52 = scmp.eq.s32.totalorder %s14, 4
      %p53 = por %p51, %p52
      %p54 = scmp.ne.s32.totalorder %s45, %s46
      %p55 = scmp.eq.s32.totalorder %s14, 0
      %p56 = por %p54, %p55
      %p57 = scmp.ne.s32.totalorder %s45, %s46
      %p58 = scmp.eq.s32.totalorder %s15, 4
      %p59 = por %p57, %p58
      %p61 = scmp.ne.s32.totalorder %s46, %s60
      %p62 = scmp.eq.s32.totalorder %s15, 0
      %p63 = por %p61, %p62
      %s65 = sadd.s32 %s64, 1
      %p68 = scmp.eq.s32.totalorder %s9, 4
      %p69 = scmp.ne.s32.totalorder %s64, %s66
      %p70 = scmp.eq.s32.totalorder %s9, 0
      %p71 = por %p69, %p70
      %p72 = scmp.ne.s32.totalorder %s64, %s66
      %p73 = scmp.eq.s32.totalorder %s14, 4
      %p74 = por %p72, %p73
      %p75 = scmp.ne.s32.totalorder %s66, %s67
      %p76 = scmp.eq.s32.totalorder %s14, 0
      %p77 = por %p75, %p76
      %p78 = scmp.ne.s32.totalorder %s66, %s67
      %p79 = scmp.eq.s32.totalorder %s15, 4
      %p80 = por %p78, %p79
      %p82 = scmp.ne.s32.totalorder %s67, %s81
      %p83 = scmp.eq.s32.totalorder %s15, 0
      %p84 = por %p82, %p83
      %s85 = ssub.s32 %s9, %s16
      %p86 = scmp.eq.s32.totalorder %s85, 0
      %s88 = sadd.s32 %s87, 1
      %s89 = scalar_select %p86, %s87, %s88
      %p92 = pneg %p86
      %p93 = scmp.eq.s32.totalorder %s9, 4
      %p94 = por %p92, %p93
      %p95 = scmp.ne.s32.totalorder %s87, %s90
      %p96 = scmp.eq.s32.totalorder %s9, 0
      %p97 = por %p95, %p96
      %p98 = scmp.ne.s32.totalorder %s87, %s90
      %p99 = scmp.eq.s32.totalorder %s14, 4
      %p100 = por %p98, %p99
      %p101 = scmp.ne.s32.totalorder %s90, %s91
      %p102 = scmp.eq.s32.totalorder %s14, 0
      %p103 = por %p101, %p102
      %p104 = scmp.ne.s32.totalorder %s90, %s91
      %p105 = scmp.eq.s32.totalorder %s15, 4
      %p106 = por %p104, %p105
      %p108 = scmp.ne.s32.totalorder %s91, %s107
      %p109 = scmp.eq.s32.totalorder %s15, 0
      %p110 = por %p108, %p109
      %p111 = scmp.le.s32.totalorder 1, %s9
      %p112 = scmp.lt.s32.totalorder %s9, 6
      %p113 = pnand %p111, %p112
      %p114 = pneg %p113
      // Predicated region
      $region9: #{tpu_custom_call.1} parent=5 // pred_check
        _
      $region10: #{tpu_custom_call.1} parent=5 // pred_check_branch
        %116 = sbr.rel (%p113) target = $region12
      $region11: #{tpu_custom_call.1} parent=5 // pred_region
        %s117 = ssub.s32 %s9, 1
        // Predicated region
        $region13: #{tpu_custom_call.1} parent=11 // pred_check
          %p118 = pneg %p56
        $region14: #{tpu_custom_call.1} parent=11 // pred_check_branch
          %120 = sbr.rel (%p118) target = $region16
        $region15: #{tpu_custom_call.1} parent=11 // pred_region
          _
        $region16: #{tpu_custom_call.1} parent=11 // pred_fallthru
          _
        // Predicated region
        $region17: #{tpu_custom_call.1} parent=11 // pred_check
          %p121 = pneg %p77
        $region18: #{tpu_custom_call.1} parent=11 // pred_check_branch
          %123 = sbr.rel (%p121) target = $region20
        $region19: #{tpu_custom_call.1} parent=11 // pred_region
          _
        $region20: #{tpu_custom_call.1} parent=11 // pred_fallthru
          _
      $region12: #{tpu_custom_call.1} parent=5 // pred_fallthru
        _
      %p124 = scmp.lt.s32.totalorder %s9, 5
      // Predicated region
      $region21: #{tpu_custom_call.1} parent=5 // pred_check
        %p125 = pneg %p124
      $region22: #{tpu_custom_call.1} parent=5 // pred_check_branch
        %127 = sbr.rel (%p125) target = $region24
      $region23: #{tpu_custom_call.1} parent=5 // pred_region
        // Predicated region
        $region25: #{tpu_custom_call.1} parent=23 // pred_check
          %p128 = pneg %p29
        $region26: #{tpu_custom_call.1} parent=23 // pred_check_branch
          %130 = sbr.rel (%p128) target = $region28
        $region27: #{tpu_custom_call.1} parent=23 // pred_region
          %s131 = smul.u32 128, %s9
          %s132 = ssub.s32 513, %s131
          %p133 = scmp.lt.s32.totalorder %s132, 128
          %s134 = scalar_select %p133, %s132, 128
          %s135 = smul.u32 128, %s134
          %p136 = scmp.lt.s32.totalorder %s131, 512
          %s137 = scalar_select %p136, %s131, 512
          %s138 = smul.addr %s137, 8
          %s139 = scalar_lea.vmem %s0, %s138
          %s140 = smul.u32 128, %s9
          %s141 = ssub.s32 513, %s140
          %p142 = scmp.lt.s32.totalorder %s141, 128
          %s143 = scalar_select %p142, %s141, 128
          %s144 = smul.u32 128, %s143
        $region28: #{tpu_custom_call.1} parent=23 // pred_fallthru
          _
      $region24: #{tpu_custom_call.1} parent=5 // pred_fallthru
        _
      %p145 = scmp.le.s32.totalorder 1, %s9
      %p146 = scmp.lt.s32.totalorder %s9, 6
      %p147 = pnand %p145, %p146
      %p148 = pneg %p147
      // Predicated region
      $region29: #{tpu_custom_call.1} parent=5 // pred_check
        _
      $region30: #{tpu_custom_call.1} parent=5 // pred_check_branch
        %150 = sbr.rel (%p147) target = $region32
      $region31: #{tpu_custom_call.1} parent=5 // pred_region
        %s151 = ssub.s32 %s9, 1
        %s152 = smul.u32 128, %s14
        %s153 = ssub.s32 513, %s152
        %p154 = scmp.lt.s32.totalorder %s153, 128
        %s155 = scalar_select %p154, %s153, 128
        %s156 = smul.u32 128, %s155
        %p157 = scmp.lt.s32.totalorder %s152, 512
        %s158 = scalar_select %p157, %s152, 512
        %s159 = smul.addr %s158, 8
        %s160 = scalar_lea.vmem %s0, %s159
        %p161 = pneg %p35
        %p162 = pneg %p32
        %p163 = pneg %p56
        %p164 = pneg %p53
        %p165 = pneg %p77
        %p166 = pneg %p74
        %p167 = pneg %p103
        %p168 = pneg %p100
        %s169 = sand.u32 %s90, 1
        %s170 = sand.u32 %s90, 1
        %s171 = smul.addr %s170, 1024
        %s172 = scalar_lea.vmem [#allocation2], %s171
        %s173 = smul.u32 128, %s14
        %s174 = ssub.s32 513, %s173
        %p175 = scmp.lt.s32.totalorder %s174, 128
        %s176 = scalar_select %p175, %s174, 128
        %s177 = smul.u32 128, %s176
        %p178 = scmp.lt.s32.totalorder %s173, 512
        %s179 = scalar_select %p178, %s173, 512
        %s180 = smul.addr %s179, 8
        %s181 = scalar_lea.vmem %s0, %s180
        %s182 = smul.u32 128, %s14
        %s183 = ssub.s32 513, %s182
        %p184 = scmp.lt.s32.totalorder %s183, 128
        %s185 = scalar_select %p184, %s183, 128
        %s186 = smul.u32 128, %s185
        %s187 = smul.u32 128, %s14
        %s188 = ssub.s32 513, %s187
        %p189 = scmp.lt.s32.totalorder %s188, 128
        %s190 = scalar_select %p189, %s188, 128
        %s191 = smul.u32 128, %s190
        %v192 = vld [vmem:[%s181] sm:$0xff]
        %v193 = vld [vmem:[%s181 + $0x8] sm:$0xff]
        %v194 = vld [vmem:[%s181 + $0x10] sm:$0xff]
        %v195 = vld [vmem:[%s181 + $0x18] sm:$0xff]
        %v196 = vld [vmem:[%s181 + $0x20] sm:$0xff]
        %v197 = vld [vmem:[%s181 + $0x28] sm:$0xff]
        %v198 = vld [vmem:[%s181 + $0x30] sm:$0xff]
        %v199 = vld [vmem:[%s181 + $0x38] sm:$0xff]
        %v200 = vld [vmem:[%s181 + $0x40] sm:$0xff]
        %v201 = vld [vmem:[%s181 + $0x48] sm:$0xff]
        %v202 = vld [vmem:[%s181 + $0x50] sm:$0xff]
        %v203 = vld [vmem:[%s181 + $0x58] sm:$0xff]
        %v204 = vld [vmem:[%s181 + $0x60] sm:$0xff]
        %v205 = vld [vmem:[%s181 + $0x68] sm:$0xff]
        %v206 = vld [vmem:[%s181 + $0x70] sm:$0xff]
        %v207 = vld [vmem:[%s181 + $0x78] sm:$0xff]
        %v208 = vld [vmem:[%s181 + $0x80] sm:$0xff]
        %v209 = vld [vmem:[%s181 + $0x88] sm:$0xff]
        %v210 = vld [vmem:[%s181 + $0x90] sm:$0xff]
        %v211 = vld [vmem:[%s181 + $0x98] sm:$0xff]
        %v212 = vld [vmem:[%s181 + $0xa0] sm:$0xff]
        %v213 = vld [vmem:[%s181 + $0xa8] sm:$0xff]
        %v214 = vld [vmem:[%s181 + $0xb0] sm:$0xff]
        %v215 = vld [vmem:[%s181 + $0xb8] sm:$0xff]
        %v216 = vld [vmem:[%s181 + $0xc0] sm:$0xff]
        %v217 = vld [vmem:[%s181 + $0xc8] sm:$0xff]
        %v218 = vld [vmem:[%s181 + $0xd0] sm:$0xff]
        %v219 = vld [vmem:[%s181 + $0xd8] sm:$0xff]
        %v220 = vld [vmem:[%s181 + $0xe0] sm:$0xff]
        %v221 = vld [vmem:[%s181 + $0xe8] sm:$0xff]
        %v222 = vld [vmem:[%s181 + $0xf0] sm:$0xff]
        %v223 = vld [vmem:[%s181 + $0xf8] sm:$0xff]
        %v224 = vld [vmem:[%s181 + $0x100] sm:$0xff]
        %v225 = vld [vmem:[%s181 + $0x108] sm:$0xff]
        %v226 = vld [vmem:[%s181 + $0x110] sm:$0xff]
        %v227 = vld [vmem:[%s181 + $0x118] sm:$0xff]
        %v228 = vld [vmem:[%s181 + $0x120] sm:$0xff]
        %v229 = vld [vmem:[%s181 + $0x128] sm:$0xff]
        %v230 = vld [vmem:[%s181 + $0x130] sm:$0xff]
        %v231 = vld [vmem:[%s181 + $0x138] sm:$0xff]
        %v232 = vld [vmem:[%s181 + $0x140] sm:$0xff]
        %v233 = vld [vmem:[%s181 + $0x148] sm:$0xff]
        %v234 = vld [vmem:[%s181 + $0x150] sm:$0xff]
        %v235 = vld [vmem:[%s181 + $0x158] sm:$0xff]
        %v236 = vld [vmem:[%s181 + $0x160] sm:$0xff]
        %v237 = vld [vmem:[%s181 + $0x168] sm:$0xff]
        %v238 = vld [vmem:[%s181 + $0x170] sm:$0xff]
        %v239 = vld [vmem:[%s181 + $0x178] sm:$0xff]
        %v240 = vld [vmem:[%s181 + $0x180] sm:$0xff]
        %v241 = vld [vmem:[%s181 + $0x188] sm:$0xff]
        %v242 = vld [vmem:[%s181 + $0x190] sm:$0xff]
        %v243 = vld [vmem:[%s181 + $0x198] sm:$0xff]
        %v244 = vld [vmem:[%s181 + $0x1a0] sm:$0xff]
        %v245 = vld [vmem:[%s181 + $0x1a8] sm:$0xff]
        %v246 = vld [vmem:[%s181 + $0x1b0] sm:$0xff]
        %v247 = vld [vmem:[%s181 + $0x1b8] sm:$0xff]
        %v248 = vld [vmem:[%s181 + $0x1c0] sm:$0xff]
        %v249 = vld [vmem:[%s181 + $0x1c8] sm:$0xff]
        %v250 = vld [vmem:[%s181 + $0x1d0] sm:$0xff]
        %v251 = vld [vmem:[%s181 + $0x1d8] sm:$0xff]
        %v252 = vld [vmem:[%s181 + $0x1e0] sm:$0xff]
        %v253 = vld [vmem:[%s181 + $0x1e8] sm:$0xff]
        %v254 = vld [vmem:[%s181 + $0x1f0] sm:$0xff]
        %v255 = vld [vmem:[%s181 + $0x1f8] sm:$0xff]
        %v256 = vld [vmem:[%s181 + $0x200] sm:$0xff]
        %v257 = vld [vmem:[%s181 + $0x208] sm:$0xff]
        %v258 = vld [vmem:[%s181 + $0x210] sm:$0xff]
        %v259 = vld [vmem:[%s181 + $0x218] sm:$0xff]
        %v260 = vld [vmem:[%s181 + $0x220] sm:$0xff]
        %v261 = vld [vmem:[%s181 + $0x228] sm:$0xff]
        %v262 = vld [vmem:[%s181 + $0x230] sm:$0xff]
        %v263 = vld [vmem:[%s181 + $0x238] sm:$0xff]
        %v264 = vld [vmem:[%s181 + $0x240] sm:$0xff]
        %v265 = vld [vmem:[%s181 + $0x248] sm:$0xff]
        %v266 = vld [vmem:[%s181 + $0x250] sm:$0xff]
        %v267 = vld [vmem:[%s181 + $0x258] sm:$0xff]
        %v268 = vld [vmem:[%s181 + $0x260] sm:$0xff]
        %v269 = vld [vmem:[%s181 + $0x268] sm:$0xff]
        %v270 = vld [vmem:[%s181 + $0x270] sm:$0xff]
        %v271 = vld [vmem:[%s181 + $0x278] sm:$0xff]
        %v272 = vld [vmem:[%s181 + $0x280] sm:$0xff]
        %v273 = vld [vmem:[%s181 + $0x288] sm:$0xff]
        %v274 = vld [vmem:[%s181 + $0x290] sm:$0xff]
        %v275 = vld [vmem:[%s181 + $0x298] sm:$0xff]
        %v276 = vld [vmem:[%s181 + $0x2a0] sm:$0xff]
        %v277 = vld [vmem:[%s181 + $0x2a8] sm:$0xff]
        %v278 = vld [vmem:[%s181 + $0x2b0] sm:$0xff]
        %v279 = vld [vmem:[%s181 + $0x2b8] sm:$0xff]
        %v280 = vld [vmem:[%s181 + $0x2c0] sm:$0xff]
        %v281 = vld [vmem:[%s181 + $0x2c8] sm:$0xff]
        %v282 = vld [vmem:[%s181 + $0x2d0] sm:$0xff]
        %v283 = vld [vmem:[%s181 + $0x2d8] sm:$0xff]
        %v284 = vld [vmem:[%s181 + $0x2e0] sm:$0xff]
        %v285 = vld [vmem:[%s181 + $0x2e8] sm:$0xff]
        %v286 = vld [vmem:[%s181 + $0x2f0] sm:$0xff]
        %v287 = vld [vmem:[%s181 + $0x2f8] sm:$0xff]
        %v288 = vld [vmem:[%s181 + $0x300] sm:$0xff]
        %v289 = vld [vmem:[%s181 + $0x308] sm:$0xff]
        %v290 = vld [vmem:[%s181 + $0x310] sm:$0xff]
        %v291 = vld [vmem:[%s181 + $0x318] sm:$0xff]
        %v292 = vld [vmem:[%s181 + $0x320] sm:$0xff]
        %v293 = vld [vmem:[%s181 + $0x328] sm:$0xff]
        %v294 = vld [vmem:[%s181 + $0x330] sm:$0xff]
        %v295 = vld [vmem:[%s181 + $0x338] sm:$0xff]
        %v296 = vld [vmem:[%s181 + $0x340] sm:$0xff]
        %v297 = vld [vmem:[%s181 + $0x348] sm:$0xff]
        %v298 = vld [vmem:[%s181 + $0x350] sm:$0xff]
        %v299 = vld [vmem:[%s181 + $0x358] sm:$0xff]
        %v300 = vld [vmem:[%s181 + $0x360] sm:$0xff]
        %v301 = vld [vmem:[%s181 + $0x368] sm:$0xff]
        %v302 = vld [vmem:[%s181 + $0x370] sm:$0xff]
        %v303 = vld [vmem:[%s181 + $0x378] sm:$0xff]
        %v304 = vld [vmem:[%s181 + $0x380] sm:$0xff]
        %v305 = vld [vmem:[%s181 + $0x388] sm:$0xff]
        %v306 = vld [vmem:[%s181 + $0x390] sm:$0xff]
        %v307 = vld [vmem:[%s181 + $0x398] sm:$0xff]
        %v308 = vld [vmem:[%s181 + $0x3a0] sm:$0xff]
        %v309 = vld [vmem:[%s181 + $0x3a8] sm:$0xff]
        %v310 = vld [vmem:[%s181 + $0x3b0] sm:$0xff]
        %v311 = vld [vmem:[%s181 + $0x3b8] sm:$0xff]
        %v312 = vld [vmem:[%s181 + $0x3c0] sm:$0xff]
        %v313 = vld [vmem:[%s181 + $0x3c8] sm:$0xff]
        %v314 = vld [vmem:[%s181 + $0x3d0] sm:$0xff]
        %v315 = vld [vmem:[%s181 + $0x3d8] sm:$0xff]
        %v316 = vld [vmem:[%s181 + $0x3e0] sm:$0xff]
        %v317 = vld [vmem:[%s181 + $0x3e8] sm:$0xff]
        %v318 = vld [vmem:[%s181 + $0x3f0] sm:$0xff]
        %v319 = vld [vmem:[%s181 + $0x3f8] sm:$0xff]
        %v320 = vld [vmem:[%s1] sm:$0xff]
        %v321 = vld [vmem:[%s1 + $0x8] sm:$0xff]
        %v322 = vld [vmem:[%s1 + $0x10] sm:$0xff]
        %v323 = vld [vmem:[%s1 + $0x18] sm:$0xff]
        %v324 = vld [vmem:[%s1 + $0x20] sm:$0xff]
        %v325 = vld [vmem:[%s1 + $0x28] sm:$0xff]
        %v326 = vld [vmem:[%s1 + $0x30] sm:$0xff]
        %v327 = vld [vmem:[%s1 + $0x38] sm:$0xff]
        %v328 = vld [vmem:[%s2] sm:$0x1]
        %v330 = vlaneseq
        %v331 = vshrl.u32 %v330, 7
        %v332 = vsub.s32 0, %v331
        %v333 = vrot.slane %v328, %v332
        %vm335 = vcmask 523264
        %v337 = vsel %vm335, %v192, 0
        %v340 = vsel %vm335, %v193, 0
        %v343 = vsel %vm335, %v194, 0
        %v346 = vsel %vm335, %v195, 0
        %v349 = vsel %vm335, %v196, 0
        %v352 = vsel %vm335, %v197, 0
        %v355 = vsel %vm335, %v198, 0
        %v358 = vsel %vm335, %v199, 0
        %v361 = vsel %vm335, %v200, 0
        %v364 = vsel %vm335, %v201, 0
        %v367 = vsel %vm335, %v202, 0
        %v370 = vsel %vm335, %v203, 0
        %v373 = vsel %vm335, %v204, 0
        %v376 = vsel %vm335, %v205, 0
        %v379 = vsel %vm335, %v206, 0
        %v382 = vsel %vm335, %v207, 0
        %v385 = vsel %vm335, %v208, 0
        %v388 = vsel %vm335, %v209, 0
        %v391 = vsel %vm335, %v210, 0
        %v394 = vsel %vm335, %v211, 0
        %v397 = vsel %vm335, %v212, 0
        %v400 = vsel %vm335, %v213, 0
        %v403 = vsel %vm335, %v214, 0
        %v406 = vsel %vm335, %v215, 0
        %v409 = vsel %vm335, %v216, 0
        %v412 = vsel %vm335, %v217, 0
        %v415 = vsel %vm335, %v218, 0
        %v418 = vsel %vm335, %v219, 0
        %v421 = vsel %vm335, %v220, 0
        %v424 = vsel %vm335, %v221, 0
        %v427 = vsel %vm335, %v222, 0
        %v430 = vsel %vm335, %v223, 0
        %v433 = vsel %vm335, %v224, 0
        %v436 = vsel %vm335, %v225, 0
        %v439 = vsel %vm335, %v226, 0
        %v442 = vsel %vm335, %v227, 0
        %v445 = vsel %vm335, %v228, 0
        %v448 = vsel %vm335, %v229, 0
        %v451 = vsel %vm335, %v230, 0
        %v454 = vsel %vm335, %v231, 0
        %v457 = vsel %vm335, %v232, 0
        %v460 = vsel %vm335, %v233, 0
        %v463 = vsel %vm335, %v234, 0
        %v466 = vsel %vm335, %v235, 0
        %v469 = vsel %vm335, %v236, 0
        %v472 = vsel %vm335, %v237, 0
        %v475 = vsel %vm335, %v238, 0
        %v478 = vsel %vm335, %v239, 0
        %v481 = vsel %vm335, %v240, 0
        %v484 = vsel %vm335, %v241, 0
        %v487 = vsel %vm335, %v242, 0
        %v490 = vsel %vm335, %v243, 0
        %v493 = vsel %vm335, %v244, 0
        %v496 = vsel %vm335, %v245, 0
        %v499 = vsel %vm335, %v246, 0
        %v502 = vsel %vm335, %v247, 0
        %v505 = vsel %vm335, %v248, 0
        %v508 = vsel %vm335, %v249, 0
        %v511 = vsel %vm335, %v250, 0
        %v514 = vsel %vm335, %v251, 0
        %v517 = vsel %vm335, %v252, 0
        %v520 = vsel %vm335, %v253, 0
        %v523 = vsel %vm335, %v254, 0
        %v526 = vsel %vm335, %v255, 0
        %v529 = vsel %vm335, %v256, 0
        %v532 = vsel %vm335, %v257, 0
        %v535 = vsel %vm335, %v258, 0
        %v538 = vsel %vm335, %v259, 0
        %v541 = vsel %vm335, %v260, 0
        %v544 = vsel %vm335, %v261, 0
        %v547 = vsel %vm335, %v262, 0
        %v550 = vsel %vm335, %v263, 0
        %v553 = vsel %vm335, %v264, 0
        %v556 = vsel %vm335, %v265, 0
        %v559 = vsel %vm335, %v266, 0
        %v562 = vsel %vm335, %v267, 0
        %v565 = vsel %vm335, %v268, 0
        %v568 = vsel %vm335, %v269, 0
        %v571 = vsel %vm335, %v270, 0
        %v574 = vsel %vm335, %v271, 0
        %v577 = vsel %vm335, %v272, 0
        %v580 = vsel %vm335, %v273, 0
        %v583 = vsel %vm335, %v274, 0
        %v586 = vsel %vm335, %v275, 0
        %v589 = vsel %vm335, %v276, 0
        %v592 = vsel %vm335, %v277, 0
        %v595 = vsel %vm335, %v278, 0
        %v598 = vsel %vm335, %v279, 0
        %v601 = vsel %vm335, %v280, 0
        %v604 = vsel %vm335, %v281, 0
        %v607 = vsel %vm335, %v282, 0
        %v610 = vsel %vm335, %v283, 0
        %v613 = vsel %vm335, %v284, 0
        %v616 = vsel %vm335, %v285, 0
        %v619 = vsel %vm335, %v286, 0
        %v622 = vsel %vm335, %v287, 0
        %v625 = vsel %vm335, %v288, 0
        %v628 = vsel %vm335, %v289, 0
        %v631 = vsel %vm335, %v290, 0
        %v634 = vsel %vm335, %v291, 0
        %v637 = vsel %vm335, %v292, 0
        %v640 = vsel %vm335, %v293, 0
        %v643 = vsel %vm335, %v294, 0
        %v646 = vsel %vm335, %v295, 0
        %v649 = vsel %vm335, %v296, 0
        %v652 = vsel %vm335, %v297, 0
        %v655 = vsel %vm335, %v298, 0
        %v658 = vsel %vm335, %v299, 0
        %v661 = vsel %vm335, %v300, 0
        %v664 = vsel %vm335, %v301, 0
        %v667 = vsel %vm335, %v302, 0
        %v670 = vsel %vm335, %v303, 0
        %v673 = vsel %vm335, %v304, 0
        %v676 = vsel %vm335, %v305, 0
        %v679 = vsel %vm335, %v306, 0
        %v682 = vsel %vm335, %v307, 0
        %v685 = vsel %vm335, %v308, 0
        %v688 = vsel %vm335, %v309, 0
        %v691 = vsel %vm335, %v310, 0
        %v694 = vsel %vm335, %v311, 0
        %v697 = vsel %vm335, %v312, 0
        %v700 = vsel %vm335, %v313, 0
        %v703 = vsel %vm335, %v314, 0
        %v706 = vsel %vm335, %v315, 0
        %v709 = vsel %vm335, %v316, 0
        %v712 = vsel %vm335, %v317, 0
        %v715 = vsel %vm335, %v318, 0
        %v718 = vsel %vm335, %v319, 0
        %720 = vmatprep.subr.mxu0 0.0
        %721 = vmatpush1.msra.mxu0 %v320
        %722 = vmatprep.subr.mxu0 0.0
        %723 = vmatpush1.msra.mxu0 %v321
        %724 = vmatprep.subr.mxu0 0.0
        %725 = vmatpush1.msra.mxu0 %v322
        %726 = vmatprep.subr.mxu0 0.0
        %727 = vmatpush1.msra.mxu0 %v323
        %728 = vmatprep.subr.mxu0 0.0
        %729 = vmatpush1.msra.mxu0 %v324
        %730 = vmatprep.subr.mxu0 0.0
        %731 = vmatpush1.msra.mxu0 %v325
        %732 = vmatprep.subr.mxu0 0.0
        %733 = vmatpush1.msra.mxu0 %v326
        %734 = vmatprep.subr.mxu0 0.0
        %735 = vmatpush1.msra.mxu0 %v327
        %736 = vmatprep.subr.mxu0 0.0
        %737 = vmatpush1.msra.mxu0 0.0
        %738 = vmatprep.subr.mxu0 0.0
        %739 = vmatpush1.msra.mxu0 0.0
        %740 = vmatprep.subr.mxu0 0.0
        %741 = vmatpush1.msra.mxu0 0.0
        %742 = vmatprep.subr.mxu0 0.0
        %743 = vmatpush1.msra.mxu0 0.0
        %744 = vmatprep.subr.mxu0 0.0
        %745 = vmatpush1.msra.mxu0 0.0
        %746 = vmatprep.subr.mxu0 0.0
        %747 = vmatpush1.msra.mxu0 0.0
        %748 = vmatprep.subr.mxu0 0.0
        %749 = vmatpush1.msra.mxu0 0.0
        %750 = vmatprep.subr.mxu0 0.0
        %751 = vmatpush1.msra.mxu0 0.0
        %752 = vmatprep.subr.mxu0 0.0
        %753 = vmatpush1.msra.mxu0 0.0
        %754 = vmatprep.subr.mxu0 0.0
        %755 = vmatpush1.msra.mxu0 0.0
        %756 = vmatprep.subr.mxu0 0.0
        %757 = vmatpush1.msra.mxu0 0.0
        %758 = vmatprep.subr.mxu0 0.0
        %759 = vmatpush1.msra.mxu0 0.0
        %760 = vmatprep.subr.mxu0 0.0
        %761 = vmatpush1.msra.mxu0 0.0
        %762 = vmatprep.subr.mxu0 0.0
        %763 = vmatpush1.msra.mxu0 0.0
        %764 = vmatprep.subr.mxu0 0.0
        %765 = vmatpush1.msra.mxu0 0.0
        %766 = vmatprep.subr.mxu0 0.0
        %767 = vmatpush1.msra.mxu0 0.0
        %768 = vmatprep.subr.mxu0 0.0
        %769 = vmatpush1.msra.mxu0 0.0
        %770 = vmatprep.subr.mxu0 0.0
        %771 = vmatpush1.msra.mxu0 0.0
        %772 = vmatprep.subr.mxu0 0.0
        %773 = vmatpush1.msra.mxu0 0.0
        %774 = vmatprep.subr.mxu0 0.0
        %775 = vmatpush1.msra.mxu0 0.0
        %776 = vmatprep.subr.mxu0 0.0
        %777 = vmatpush1.msra.mxu0 0.0
        %778 = vmatprep.subr.mxu0 0.0
        %779 = vmatpush1.msra.mxu0 0.0
        %780 = vmatprep.subr.mxu0 0.0
        %781 = vmatpush1.msra.mxu0 0.0
        %782 = vmatprep.subr.mxu0 0.0
        %783 = vmatpush1.msra.mxu0 0.0
        %784 = vmatprep.mubr.f32.mxu0 0.0
        %785 = vmatmul.mubr.f32.gmra.mrb[0].mxu0 %v337
        %v786 = vpop.f32.mrb[0].mxu0
        %v787 = vadd.f32 %v333, %v786
        %v788 = vpop.f32.mrb[0].mxu0
        %789 = vmatprep.mubr.f32.mxu0 0.0
        %790 = vmatmul.mubr.f32.gmra.mrb[0].mxu0 %v340
        %v791 = vpop.f32.mrb[0].mxu0
        %v792 = vadd.f32 %v333, %v791
        %v793 = vpop.f32.mrb[0].mxu0
        %794 = vmatprep.mubr.f32.mxu0 0.0
        %795 = vmatmul.mubr.f32.gmra.mrb[0].mxu0 %v343
        %v796 = vpop.f32.mrb[0].mxu0
        %v797 = vadd.f32 %v333, %v796
        %v798 = vpop.f32.mrb[0].mxu0
        %799 = vmatprep.mubr.f32.mxu0 0.0
        %800 = vmatmul.mubr.f32.gmra.mrb[0].mxu0 %v346
        %v801 = vpop.f32.mrb[0].mxu0
        %v802 = vadd.f32 %v333, %v801
        %v803 = vpop.f32.mrb[0].mxu0
        %804 = vmatprep.mubr.f32.mxu0 0.0
        %805 = vmatmul.mubr.f32.gmra.mrb[0].mxu0 %v349
        %v806 = vpop.f32.mrb[0].mxu0
        %v807 = vadd.f32 %v333, %v806
        %v808 = vpop.f32.mrb[0].mxu0
        %809 = vmatprep.mubr.f32.mxu0 0.0
        %810 = vmatmul.mubr.f32.gmra.mrb[0].mxu0 %v352
        %v811 = vpop.f32.mrb[0].mxu0
        %v812 = vadd.f32 %v333, %v811
        %v813 = vpop.f32.mrb[0].mxu0
        %814 = vmatprep.mubr.f32.mxu0 0.0
        %815 = vmatmul.mubr.f32.gmra.mrb[0].mxu0 %v355
        %v816 = vpop.f32.mrb[0].mxu0
        %v817 = vadd.f32 %v333, %v816
        %v818 = vpop.f32.mrb[0].mxu0
        %819 = vmatprep.mubr.f32.mxu0 0.0
        %820 = vmatmul.mubr.f32.gmra.mrb[0].mxu0 %v358
        %v821 = vpop.f32.mrb[0].mxu0
        %v822 = vadd.f32 %v333, %v821
        %v823 = vpop.f32.mrb[0].mxu0
        %824 = vmatprep.mubr.f32.mxu0 0.0
        %825 = vmatmul.mubr.f32.gmra.mrb[0].mxu0 %v361
        %v826 = vpop.f32.mrb[0].mxu0
        %v827 = vadd.f32 %v333, %v826
        %v828 = vpop.f32.mrb[0].mxu0
        %829 = vmatprep.mubr.f32.mxu0 0.0
        %830 = vmatmul.mubr.f32.gmra.mrb[0].mxu0 %v364
        %v831 = vpop.f32.mrb[0].mxu0
        %v832 = vadd.f32 %v333, %v831
        %v833 = vpop.f32.mrb[0].mxu0
        %834 = vmatprep.mubr.f32.mxu0 0.0
        %835 = vmatmul.mubr.f32.gmra.mrb[0].mxu0 %v367
        %v836 = vpop.f32.mrb[0].mxu0
        %v837 = vadd.f32 %v333, %v836
        %v838 = vpop.f32.mrb[0].mxu0
        %839 = vmatprep.mubr.f32.mxu0 0.0
        %840 = vmatmul.mubr.f32.gmra.mrb[0].mxu0 %v370
        %v841 = vpop.f32.mrb[0].mxu0
        %v842 = vadd.f32 %v333, %v841
        %v843 = vpop.f32.mrb[0].mxu0
        %844 = vmatprep.mubr.f32.mxu0 0.0
        %845 = vmatmul.mubr.f32.gmra.mrb[0].mxu0 %v373
        %v846 = vpop.f32.mrb[0].mxu0
        %v847 = vadd.f32 %v333, %v846
        %v848 = vpop.f32.mrb[0].mxu0
        %849 = vmatprep.mubr.f32.mxu0 0.0
        %850 = vmatmul.mubr.f32.gmra.mrb[0].mxu0 %v376
        %v851 = vpop.f32.mrb[0].mxu0
        %v852 = vadd.f32 %v333, %v851
        %v853 = vpop.f32.mrb[0].mxu0
        %854 = vmatprep.mubr.f32.mxu0 0.0
        %855 = vmatmul.mubr.f32.gmra.mrb[0].mxu0 %v379
        %v856 = vpop.f32.mrb[0].mxu0
        %v857 = vadd.f32 %v333, %v856
        %v858 = vpop.f32.mrb[0].mxu0
        %859 = vmatprep.mubr.f32.mxu0 0.0
        %860 = vmatmul.mubr.f32.gmra.mrb[0].mxu0 %v382
        %v861 = vpop.f32.mrb[0].mxu0
        %v862 = vadd.f32 %v333, %v861
        %v863 = vpop.f32.mrb[0].mxu0
        %864 = vmatprep.mubr.f32.mxu0 0.0
        %865 = vmatmul.mubr.f32.gmra.mrb[0].mxu0 %v385
        %v866 = vpop.f32.mrb[0].mxu0
        %v867 = vadd.f32 %v333, %v866
        %v868 = vpop.f32.mrb[0].mxu0
        %869 = vmatprep.mubr.f32.mxu0 0.0
        %870 = vmatmul.mubr.f32.gmra.mrb[0].mxu0 %v388
        %v871 = vpop.f32.mrb[0].mxu0
        %v872 = vadd.f32 %v333, %v871
        %v873 = vpop.f32.mrb[0].mxu0
        %874 = vmatprep.mubr.f32.mxu0 0.0
        %875 = vmatmul.mubr.f32.gmra.mrb[0].mxu0 %v391
        %v876 = vpop.f32.mrb[0].mxu0
        %v877 = vadd.f32 %v333, %v876
        %v878 = vpop.f32.mrb[0].mxu0
        %879 = vmatprep.mubr.f32.mxu0 0.0
        %880 = vmatmul.mubr.f32.gmra.mrb[0].mxu0 %v394
        %v881 = vpop.f32.mrb[0].mxu0
        %v882 = vadd.f32 %v333, %v881
        %v883 = vpop.f32.mrb[0].mxu0
        %884 = vmatprep.mubr.f32.mxu0 0.0
        %885 = vmatmul.mubr.f32.gmra.mrb[0].mxu0 %v397
        %v886 = vpop.f32.mrb[0].mxu0
        %v887 = vadd.f32 %v333, %v886
        %v888 = vpop.f32.mrb[0].mxu0
        %889 = vmatprep.mubr.f32.mxu0 0.0
        %890 = vmatmul.mubr.f32.gmra.mrb[0].mxu0 %v400
        %v891 = vpop.f32.mrb[0].mxu0
        %v892 = vadd.f32 %v333, %v891
        %v893 = vpop.f32.mrb[0].mxu0
        %894 = vmatprep.mubr.f32.mxu0 0.0
        %895 = vmatmul.mubr.f32.gmra.mrb[0].mxu0 %v403
        %v896 = vpop.f32.mrb[0].mxu0
        %v897 = vadd.f32 %v333, %v896
        %v898 = vpop.f32.mrb[0].mxu0
        %899 = vmatprep.mubr.f32.mxu0 0.0
        %900 = vmatmul.mubr.f32.gmra.mrb[0].mxu0 %v406
        %v901 = vpop.f32.mrb[0].mxu0
        %v902 = vadd.f32 %v333, %v901
        %v903 = vpop.f32.mrb[0].mxu0
        %904 = vmatprep.mubr.f32.mxu0 0.0
        %905 = vmatmul.mubr.f32.gmra.mrb[0].mxu0 %v409
        %v906 = vpop.f32.mrb[0].mxu0
        %v907 = vadd.f32 %v333, %v906
        %v908 = vpop.f32.mrb[0].mxu0
        %909 = vmatprep.mubr.f32.mxu0 0.0
        %910 = vmatmul.mubr.f32.gmra.mrb[0].mxu0 %v412
        %v911 = vpop.f32.mrb[0].mxu0
        %v912 = vadd.f32 %v333, %v911
        %v913 = vpop.f32.mrb[0].mxu0
        %914 = vmatprep.mubr.f32.mxu0 0.0
        %915 = vmatmul.mubr.f32.gmra.mrb[0].mxu0 %v415
        %v916 = vpop.f32.mrb[0].mxu0
        %v917 = vadd.f32 %v333, %v916
        %v918 = vpop.f32.mrb[0].mxu0
        %919 = vmatprep.mubr.f32.mxu0 0.0
        %920 = vmatmul.mubr.f32.gmra.mrb[0].mxu0 %v418
        %v921 = vpop.f32.mrb[0].mxu0
        %v922 = vadd.f32 %v333, %v921
        %v923 = vpop.f32.mrb[0].mxu0
        %924 = vmatprep.mubr.f32.mxu0 0.0
        %925 = vmatmul.mubr.f32.gmra.mrb[0].mxu0 %v421
        %v926 = vpop.f32.mrb[0].mxu0
        %v927 = vadd.f32 %v333, %v926
        %v928 = vpop.f32.mrb[0].mxu0
        %929 = vmatprep.mubr.f32.mxu0 0.0
        %930 = vmatmul.mubr.f32.gmra.mrb[0].mxu0 %v424
        %v931 = vpop.f32.mrb[0].mxu0
        %v932 = vadd.f32 %v333, %v931
        %v933 = vpop.f32.mrb[0].mxu0
        %934 = vmatprep.mubr.f32.mxu0 0.0
        %935 = vmatmul.mubr.f32.gmra.mrb[0].mxu0 %v427
        %v936 = vpop.f32.mrb[0].mxu0
        %v937 = vadd.f32 %v333, %v936
        %v938 = vpop.f32.mrb[0].mxu0
        %939 = vmatprep.mubr.f32.mxu0 0.0
        %940 = vmatmul.mubr.f32.gmra.mrb[0].mxu0 %v430
        %v941 = vpop.f32.mrb[0].mxu0
        %v942 = vadd.f32 %v333, %v941
        %v943 = vpop.f32.mrb[0].mxu0
        %944 = vmatprep.mubr.f32.mxu0 0.0
        %945 = vmatmul.mubr.f32.gmra.mrb[0].mxu0 %v433
        %v946 = vpop.f32.mrb[0].mxu0
        %v947 = vadd.f32 %v333, %v946
        %v948 = vpop.f32.mrb[0].mxu0
        %949 = vmatprep.mubr.f32.mxu0 0.0
        %950 = vmatmul.mubr.f32.gmra.mrb[0].mxu0 %v436
        %v951 = vpop.f32.mrb[0].mxu0
        %v952 = vadd.f32 %v333, %v951
        %v953 = vpop.f32.mrb[0].mxu0
        %954 = vmatprep.mubr.f32.mxu0 0.0
        %955 = vmatmul.mubr.f32.gmra.mrb[0].mxu0 %v439
        %v956 = vpop.f32.mrb[0].mxu0
        %v957 = vadd.f32 %v333, %v956
        %v958 = vpop.f32.mrb[0].mxu0
        %959 = vmatprep.mubr.f32.mxu0 0.0
        %960 = vmatmul.mubr.f32.gmra.mrb[0].mxu0 %v442
        %v961 = vpop.f32.mrb[0].mxu0
        %v962 = vadd.f32 %v333, %v961
        %v963 = vpop.f32.mrb[0].mxu0
        %964 = vmatprep.mubr.f32.mxu0 0.0
        %965 = vmatmul.mubr.f32.gmra.mrb[0].mxu0 %v445
        %v966 = vpop.f32.mrb[0].mxu0
        %v967 = vadd.f32 %v333, %v966
        %v968 = vpop.f32.mrb[0].mxu0
        %969 = vmatprep.mubr.f32.mxu0 0.0
        %970 = vmatmul.mubr.f32.gmra.mrb[0].mxu0 %v448
        %v971 = vpop.f32.mrb[0].mxu0
        %v972 = vadd.f32 %v333, %v971
        %v973 = vpop.f32.mrb[0].mxu0
        %974 = vmatprep.mubr.f32.mxu0 0.0
        %975 = vmatmul.mubr.f32.gmra.mrb[0].mxu0 %v451
        %v976 = vpop.f32.mrb[0].mxu0
        %v977 = vadd.f32 %v333, %v976
        %v978 = vpop.f32.mrb[0].mxu0
        %979 = vmatprep.mubr.f32.mxu0 0.0
        %980 = vmatmul.mubr.f32.gmra.mrb[0].mxu0 %v454
        %v981 = vpop.f32.mrb[0].mxu0
        %v982 = vadd.f32 %v333, %v981
        %v983 = vpop.f32.mrb[0].mxu0
        %984 = vmatprep.mubr.f32.mxu0 0.0
        %985 = vmatmul.mubr.f32.gmra.mrb[0].mxu0 %v457
        %v986 = vpop.f32.mrb[0].mxu0
        %v987 = vadd.f32 %v333, %v986
        %v988 = vpop.f32.mrb[0].mxu0
        %989 = vmatprep.mubr.f32.mxu0 0.0
        %990 = vmatmul.mubr.f32.gmra.mrb[0].mxu0 %v460
        %v991 = vpop.f32.mrb[0].mxu0
        %v992 = vadd.f32 %v333, %v991
        %v993 = vpop.f32.mrb[0].mxu0
        %994 = vmatprep.mubr.f32.mxu0 0.0
        %995 = vmatmul.mubr.f32.gmra.mrb[0].mxu0 %v463
        %v996 = vpop.f32.mrb[0].mxu0
        %v997 = vadd.f32 %v333, %v996
        %v998 = vpop.f32.mrb[0].mxu0
        %999 = vmatprep.mubr.f32.mxu0 0.0
        %1000 = vmatmul.mubr.f32.gmra.mrb[0].mxu0 %v466
        %v1001 = vpop.f32.mrb[0].mxu0
        %v1002 = vadd.f32 %v333, %v1001
        %v1003 = vpop.f32.mrb[0].mxu0
        %1004 = vmatprep.mubr.f32.mxu0 0.0
        %1005 = vmatmul.mubr.f32.gmra.mrb[0].mxu0 %v469
        %v1006 = vpop.f32.mrb[0].mxu0
        %v1007 = vadd.f32 %v333, %v1006
        %v1008 = vpop.f32.mrb[0].mxu0
        %1009 = vmatprep.mubr.f32.mxu0 0.0
        %1010 = vmatmul.mubr.f32.gmra.mrb[0].mxu0 %v472
        %v1011 = vpop.f32.mrb[0].mxu0
        %v1012 = vadd.f32 %v333, %v1011
        %v1013 = vpop.f32.mrb[0].mxu0
        %1014 = vmatprep.mubr.f32.mxu0 0.0
        %1015 = vmatmul.mubr.f32.gmra.mrb[0].mxu0 %v475
        %v1016 = vpop.f32.mrb[0].mxu0
        %v1017 = vadd.f32 %v333, %v1016
        %v1018 = vpop.f32.mrb[0].mxu0
        %1019 = vmatprep.mubr.f32.mxu0 0.0
        %1020 = vmatmul.mubr.f32.gmra.mrb[0].mxu0 %v478
        %v1021 = vpop.f32.mrb[0].mxu0
        %v1022 = vadd.f32 %v333, %v1021
        %v1023 = vpop.f32.mrb[0].mxu0
        %1024 = vmatprep.mubr.f32.mxu0 0.0
        %1025 = vmatmul.mubr.f32.gmra.mrb[0].mxu0 %v481
        %v1026 = vpop.f32.mrb[0].mxu0
        %v1027 = vadd.f32 %v333, %v1026
        %v1028 = vpop.f32.mrb[0].mxu0
        %1029 = vmatprep.mubr.f32.mxu0 0.0
        %1030 = vmatmul.mubr.f32.gmra.mrb[0].mxu0 %v484
        %v1031 = vpop.f32.mrb[0].mxu0
        %v1032 = vadd.f32 %v333, %v1031
        %v1033 = vpop.f32.mrb[0].mxu0
        %1034 = vmatprep.mubr.f32.mxu0 0.0
        %1035 = vmatmul.mubr.f32.gmra.mrb[0].mxu0 %v487
        %v1036 = vpop.f32.mrb[0].mxu0
        %v1037 = vadd.f32 %v333, %v1036
        %v1038 = vpop.f32.mrb[0].mxu0
        %1039 = vmatprep.mubr.f32.mxu0 0.0
        %1040 = vmatmul.mubr.f32.gmra.mrb[0].mxu0 %v490
        %v1041 = vpop.f32.mrb[0].mxu0
        %v1042 = vadd.f32 %v333, %v1041
        %v1043 = vpop.f32.mrb[0].mxu0
        %1044 = vmatprep.mubr.f32.mxu0 0.0
        %1045 = vmatmul.mubr.f32.gmra.mrb[0].mxu0 %v493
        %v1046 = vpop.f32.mrb[0].mxu0
        %v1047 = vadd.f32 %v333, %v1046
        %v1048 = vpop.f32.mrb[0].mxu0
        %1049 = vmatprep.mubr.f32.mxu0 0.0
        %1050 = vmatmul.mubr.f32.gmra.mrb[0].mxu0 %v496
        %v1051 = vpop.f32.mrb[0].mxu0
        %v1052 = vadd.f32 %v333, %v1051
        %v1053 = vpop.f32.mrb[0].mxu0
        %1054 = vmatprep.mubr.f32.mxu0 0.0
        %1055 = vmatmul.mubr.f32.gmra.mrb[0].mxu0 %v499
        %v1056 = vpop.f32.mrb[0].mxu0
        %v1057 = vadd.f32 %v333, %v1056
        %v1058 = vpop.f32.mrb[0].mxu0
        %1059 = vmatprep.mubr.f32.mxu0 0.0
        %1060 = vmatmul.mubr.f32.gmra.mrb[0].mxu0 %v502
        %v1061 = vpop.f32.mrb[0].mxu0
        %v1062 = vadd.f32 %v333, %v1061
        %v1063 = vpop.f32.mrb[0].mxu0
        %1064 = vmatprep.mubr.f32.mxu0 0.0
        %1065 = vmatmul.mubr.f32.gmra.mrb[0].mxu0 %v505
        %v1066 = vpop.f32.mrb[0].mxu0
        %v1067 = vadd.f32 %v333, %v1066
        %v1068 = vpop.f32.mrb[0].mxu0
        %1069 = vmatprep.mubr.f32.mxu0 0.0
        %1070 = vmatmul.mubr.f32.gmra.mrb[0].mxu0 %v508
        %v1071 = vpop.f32.mrb[0].mxu0
        %v1072 = vadd.f32 %v333, %v1071
        %v1073 = vpop.f32.mrb[0].mxu0
        %1074 = vmatprep.mubr.f32.mxu0 0.0
        %1075 = vmatmul.mubr.f32.gmra.mrb[0].mxu0 %v511
        %v1076 = vpop.f32.mrb[0].mxu0
        %v1077 = vadd.f32 %v333, %v1076
        %v1078 = vpop.f32.mrb[0].mxu0
        %1079 = vmatprep.mubr.f32.mxu0 0.0
        %1080 = vmatmul.mubr.f32.gmra.mrb[0].mxu0 %v514
        %v1081 = vpop.f32.mrb[0].mxu0
        %v1082 = vadd.f32 %v333, %v1081
        %v1083 = vpop.f32.mrb[0].mxu0
        %1084 = vmatprep.mubr.f32.mxu0 0.0
        %1085 = vmatmul.mubr.f32.gmra.mrb[0].mxu0 %v517
        %v1086 = vpop.f32.mrb[0].mxu0
        %v1087 = vadd.f32 %v333, %v1086
        %v1088 = vpop.f32.mrb[0].mxu0
        %1089 = vmatprep.mubr.f32.mxu0 0.0
        %1090 = vmatmul.mubr.f32.gmra.mrb[0].mxu0 %v520
        %v1091 = vpop.f32.mrb[0].mxu0
        %v1092 = vadd.f32 %v333, %v1091
        %v1093 = vpop.f32.mrb[0].mxu0
        %1094 = vmatprep.mubr.f32.mxu0 0.0
        %1095 = vmatmul.mubr.f32.gmra.mrb[0].mxu0 %v523
        %v1096 = vpop.f32.mrb[0].mxu0
        %v1097 = vadd.f32 %v333, %v1096
        %v1098 = vpop.f32.mrb[0].mxu0
        %1099 = vmatprep.mubr.f32.mxu0 0.0
        %1100 = vmatmul.mubr.f32.gmra.mrb[0].mxu0 %v526
        %v1101 = vpop.f32.mrb[0].mxu0
        %v1102 = vadd.f32 %v333, %v1101
        %v1103 = vpop.f32.mrb[0].mxu0
        %1104 = vmatprep.mubr.f32.mxu0 0.0
        %1105 = vmatmul.mubr.f32.gmra.mrb[0].mxu0 %v529
        %v1106 = vpop.f32.mrb[0].mxu0
        %v1107 = vadd.f32 %v333, %v1106
        %v1108 = vpop.f32.mrb[0].mxu0
        %1109 = vmatprep.mubr.f32.mxu0 0.0
        %1110 = vmatmul.mubr.f32.gmra.mrb[0].mxu0 %v532
        %v1111 = vpop.f32.mrb[0].mxu0
        %v1112 = vadd.f32 %v333, %v1111
        %v1113 = vpop.f32.mrb[0].mxu0
        %1114 = vmatprep.mubr.f32.mxu0 0.0
        %1115 = vmatmul.mubr.f32.gmra.mrb[0].mxu0 %v535
        %v1116 = vpop.f32.mrb[0].mxu0
        %v1117 = vadd.f32 %v333, %v1116
        %v1118 = vpop.f32.mrb[0].mxu0
        %1119 = vmatprep.mubr.f32.mxu0 0.0
        %1120 = vmatmul.mubr.f32.gmra.mrb[0].mxu0 %v538
        %v1121 = vpop.f32.mrb[0].mxu0
        %v1122 = vadd.f32 %v333, %v1121
        %v1123 = vpop.f32.mrb[0].mxu0
        %1124 = vmatprep.mubr.f32.mxu0 0.0
        %1125 = vmatmul.mubr.f32.gmra.mrb[0].mxu0 %v541
        %v1126 = vpop.f32.mrb[0].mxu0
        %v1127 = vadd.f32 %v333, %v1126
        %v1128 = vpop.f32.mrb[0].mxu0
        %1129 = vmatprep.mubr.f32.mxu0 0.0
        %1130 = vmatmul.mubr.f32.gmra.mrb[0].mxu0 %v544
        %v1131 = vpop.f32.mrb[0].mxu0
        %v1132 = vadd.f32 %v333, %v1131
        %v1133 = vpop.f32.mrb[0].mxu0
        %1134 = vmatprep.mubr.f32.mxu0 0.0
        %1135 = vmatmul.mubr.f32.gmra.mrb[0].mxu0 %v547
        %v1136 = vpop.f32.mrb[0].mxu0
        %v1137 = vadd.f32 %v333, %v1136
        %v1138 = vpop.f32.mrb[0].mxu0
        %1139 = vmatprep.mubr.f32.mxu0 0.0
        %1140 = vmatmul.mubr.f32.gmra.mrb[0].mxu0 %v550
        %v1141 = vpop.f32.mrb[0].mxu0
        %v1142 = vadd.f32 %v333, %v1141
        %v1143 = vpop.f32.mrb[0].mxu0
        %1144 = vmatprep.mubr.f32.mxu0 0.0
        %1145 = vmatmul.mubr.f32.gmra.mrb[0].mxu0 %v553
        %v1146 = vpop.f32.mrb[0].mxu0
        %v1147 = vadd.f32 %v333, %v1146
        %v1148 = vpop.f32.mrb[0].mxu0
        %1149 = vmatprep.mubr.f32.mxu0 0.0
        %1150 = vmatmul.mubr.f32.gmra.mrb[0].mxu0 %v556
        %v1151 = vpop.f32.mrb[0].mxu0
        %v1152 = vadd.f32 %v333, %v1151
        %v1153 = vpop.f32.mrb[0].mxu0
        %1154 = vmatprep.mubr.f32.mxu0 0.0
        %1155 = vmatmul.mubr.f32.gmra.mrb[0].mxu0 %v559
        %v1156 = vpop.f32.mrb[0].mxu0
        %v1157 = vadd.f32 %v333, %v1156
        %v1158 = vpop.f32.mrb[0].mxu0
        %1159 = vmatprep.mubr.f32.mxu0 0.0
        %1160 = vmatmul.mubr.f32.gmra.mrb[0].mxu0 %v562
        %v1161 = vpop.f32.mrb[0].mxu0
        %v1162 = vadd.f32 %v333, %v1161
        %v1163 = vpop.f32.mrb[0].mxu0
        %1164 = vmatprep.mubr.f32.mxu0 0.0
        %1165 = vmatmul.mubr.f32.gmra.mrb[0].mxu0 %v565
        %v1166 = vpop.f32.mrb[0].mxu0
        %v1167 = vadd.f32 %v333, %v1166
        %v1168 = vpop.f32.mrb[0].mxu0
        %1169 = vmatprep.mubr.f32.mxu0 0.0
        %1170 = vmatmul.mubr.f32.gmra.mrb[0].mxu0 %v568
        %v1171 = vpop.f32.mrb[0].mxu0
        %v1172 = vadd.f32 %v333, %v1171
        %v1173 = vpop.f32.mrb[0].mxu0
        %1174 = vmatprep.mubr.f32.mxu0 0.0
        %1175 = vmatmul.mubr.f32.gmra.mrb[0].mxu0 %v571
        %v1176 = vpop.f32.mrb[0].mxu0
        %v1177 = vadd.f32 %v333, %v1176
        %v1178 = vpop.f32.mrb[0].mxu0
        %1179 = vmatprep.mubr.f32.mxu0 0.0
        %1180 = vmatmul.mubr.f32.gmra.mrb[0].mxu0 %v574
        %v1181 = vpop.f32.mrb[0].mxu0
        %v1182 = vadd.f32 %v333, %v1181
        %v1183 = vpop.f32.mrb[0].mxu0
        %1184 = vmatprep.mubr.f32.mxu0 0.0
        %1185 = vmatmul.mubr.f32.gmra.mrb[0].mxu0 %v577
        %v1186 = vpop.f32.mrb[0].mxu0
        %v1187 = vadd.f32 %v333, %v1186
        %v1188 = vpop.f32.mrb[0].mxu0
        %1189 = vmatprep.mubr.f32.mxu0 0.0
        %1190 = vmatmul.mubr.f32.gmra.mrb[0].mxu0 %v580
        %v1191 = vpop.f32.mrb[0].mxu0
        %v1192 = vadd.f32 %v333, %v1191
        %v1193 = vpop.f32.mrb[0].mxu0
        %1194 = vmatprep.mubr.f32.mxu0 0.0
        %1195 = vmatmul.mubr.f32.gmra.mrb[0].mxu0 %v583
        %v1196 = vpop.f32.mrb[0].mxu0
        %v1197 = vadd.f32 %v333, %v1196
        %v1198 = vpop.f32.mrb[0].mxu0
        %1199 = vmatprep.mubr.f32.mxu0 0.0
        %1200 = vmatmul.mubr.f32.gmra.mrb[0].mxu0 %v586
        %v1201 = vpop.f32.mrb[0].mxu0
        %v1202 = vadd.f32 %v333, %v1201
        %v1203 = vpop.f32.mrb[0].mxu0
        %1204 = vmatprep.mubr.f32.mxu0 0.0
        %1205 = vmatmul.mubr.f32.gmra.mrb[0].mxu0 %v589
        %v1206 = vpop.f32.mrb[0].mxu0
        %v1207 = vadd.f32 %v333, %v1206
        %v1208 = vpop.f32.mrb[0].mxu0
        %1209 = vmatprep.mubr.f32.mxu0 0.0
        %1210 = vmatmul.mubr.f32.gmra.mrb[0].mxu0 %v592
        %v1211 = vpop.f32.mrb[0].mxu0
        %v1212 = vadd.f32 %v333, %v1211
        %v1213 = vpop.f32.mrb[0].mxu0
        %1214 = vmatprep.mubr.f32.mxu0 0.0
        %1215 = vmatmul.mubr.f32.gmra.mrb[0].mxu0 %v595
        %v1216 = vpop.f32.mrb[0].mxu0
        %v1217 = vadd.f32 %v333, %v1216
        %v1218 = vpop.f32.mrb[0].mxu0
        %1219 = vmatprep.mubr.f32.mxu0 0.0
        %1220 = vmatmul.mubr.f32.gmra.mrb[0].mxu0 %v598
        %v1221 = vpop.f32.mrb[0].mxu0
        %v1222 = vadd.f32 %v333, %v1221
        %v1223 = vpop.f32.mrb[0].mxu0
        %1224 = vmatprep.mubr.f32.mxu0 0.0
        %1225 = vmatmul.mubr.f32.gmra.mrb[0].mxu0 %v601
        %v1226 = vpop.f32.mrb[0].mxu0
        %v1227 = vadd.f32 %v333, %v1226
        %v1228 = vpop.f32.mrb[0].mxu0
        %1229 = vmatprep.mubr.f32.mxu0 0.0
        %1230 = vmatmul.mubr.f32.gmra.mrb[0].mxu0 %v604
        %v1231 = vpop.f32.mrb[0].mxu0
        %v1232 = vadd.f32 %v333, %v1231
        %v1233 = vpop.f32.mrb[0].mxu0
        %1234 = vmatprep.mubr.f32.mxu0 0.0
        %1235 = vmatmul.mubr.f32.gmra.mrb[0].mxu0 %v607
        %v1236 = vpop.f32.mrb[0].mxu0
        %v1237 = vadd.f32 %v333, %v1236
        %v1238 = vpop.f32.mrb[0].mxu0
        %1239 = vmatprep.mubr.f32.mxu0 0.0
        %1240 = vmatmul.mubr.f32.gmra.mrb[0].mxu0 %v610
        %v1241 = vpop.f32.mrb[0].mxu0
        %v1242 = vadd.f32 %v333, %v1241
        %v1243 = vpop.f32.mrb[0].mxu0
        %1244 = vmatprep.mubr.f32.mxu0 0.0
        %1245 = vmatmul.mubr.f32.gmra.mrb[0].mxu0 %v613
        %v1246 = vpop.f32.mrb[0].mxu0
        %v1247 = vadd.f32 %v333, %v1246
        %v1248 = vpop.f32.mrb[0].mxu0
        %1249 = vmatprep.mubr.f32.mxu0 0.0
        %1250 = vmatmul.mubr.f32.gmra.mrb[0].mxu0 %v616
        %v1251 = vpop.f32.mrb[0].mxu0
        %v1252 = vadd.f32 %v333, %v1251
        %v1253 = vpop.f32.mrb[0].mxu0
        %1254 = vmatprep.mubr.f32.mxu0 0.0
        %1255 = vmatmul.mubr.f32.gmra.mrb[0].mxu0 %v619
        %v1256 = vpop.f32.mrb[0].mxu0
        %v1257 = vadd.f32 %v333, %v1256
        %v1258 = vpop.f32.mrb[0].mxu0
        %1259 = vmatprep.mubr.f32.mxu0 0.0
        %1260 = vmatmul.mubr.f32.gmra.mrb[0].mxu0 %v622
        %v1261 = vpop.f32.mrb[0].mxu0
        %v1262 = vadd.f32 %v333, %v1261
        %v1263 = vpop.f32.mrb[0].mxu0
        %1264 = vmatprep.mubr.f32.mxu0 0.0
        %1265 = vmatmul.mubr.f32.gmra.mrb[0].mxu0 %v625
        %v1266 = vpop.f32.mrb[0].mxu0
        %v1267 = vadd.f32 %v333, %v1266
        %v1268 = vpop.f32.mrb[0].mxu0
        %1269 = vmatprep.mubr.f32.mxu0 0.0
        %1270 = vmatmul.mubr.f32.gmra.mrb[0].mxu0 %v628
        %v1271 = vpop.f32.mrb[0].mxu0
        %v1272 = vadd.f32 %v333, %v1271
        %v1273 = vpop.f32.mrb[0].mxu0
        %1274 = vmatprep.mubr.f32.mxu0 0.0
        %1275 = vmatmul.mubr.f32.gmra.mrb[0].mxu0 %v631
        %v1276 = vpop.f32.mrb[0].mxu0
        %v1277 = vadd.f32 %v333, %v1276
        %v1278 = vpop.f32.mrb[0].mxu0
        %1279 = vmatprep.mubr.f32.mxu0 0.0
        %1280 = vmatmul.mubr.f32.gmra.mrb[0].mxu0 %v634
        %v1281 = vpop.f32.mrb[0].mxu0
        %v1282 = vadd.f32 %v333, %v1281
        %v1283 = vpop.f32.mrb[0].mxu0
        %1284 = vmatprep.mubr.f32.mxu0 0.0
        %1285 = vmatmul.mubr.f32.gmra.mrb[0].mxu0 %v637
        %v1286 = vpop.f32.mrb[0].mxu0
        %v1287 = vadd.f32 %v333, %v1286
        %v1288 = vpop.f32.mrb[0].mxu0
        %1289 = vmatprep.mubr.f32.mxu0 0.0
        %1290 = vmatmul.mubr.f32.gmra.mrb[0].mxu0 %v640
        %v1291 = vpop.f32.mrb[0].mxu0
        %v1292 = vadd.f32 %v333, %v1291
        %v1293 = vpop.f32.mrb[0].mxu0
        %1294 = vmatprep.mubr.f32.mxu0 0.0
        %1295 = vmatmul.mubr.f32.gmra.mrb[0].mxu0 %v643
        %v1296 = vpop.f32.mrb[0].mxu0
        %v1297 = vadd.f32 %v333, %v1296
        %v1298 = vpop.f32.mrb[0].mxu0
        %1299 = vmatprep.mubr.f32.mxu0 0.0
        %1300 = vmatmul.mubr.f32.gmra.mrb[0].mxu0 %v646
        %v1301 = vpop.f32.mrb[0].mxu0
        %v1302 = vadd.f32 %v333, %v1301
        %v1303 = vpop.f32.mrb[0].mxu0
        %1304 = vmatprep.mubr.f32.mxu0 0.0
        %1305 = vmatmul.mubr.f32.gmra.mrb[0].mxu0 %v649
        %v1306 = vpop.f32.mrb[0].mxu0
        %v1307 = vadd.f32 %v333, %v1306
        %v1308 = vpop.f32.mrb[0].mxu0
        %1309 = vmatprep.mubr.f32.mxu0 0.0
        %1310 = vmatmul.mubr.f32.gmra.mrb[0].mxu0 %v652
        %v1311 = vpop.f32.mrb[0].mxu0
        %v1312 = vadd.f32 %v333, %v1311
        %v1313 = vpop.f32.mrb[0].mxu0
        %1314 = vmatprep.mubr.f32.mxu0 0.0
        %1315 = vmatmul.mubr.f32.gmra.mrb[0].mxu0 %v655
        %v1316 = vpop.f32.mrb[0].mxu0
        %v1317 = vadd.f32 %v333, %v1316
        %v1318 = vpop.f32.mrb[0].mxu0
        %1319 = vmatprep.mubr.f32.mxu0 0.0
        %1320 = vmatmul.mubr.f32.gmra.mrb[0].mxu0 %v658
        %v1321 = vpop.f32.mrb[0].mxu0
        %v1322 = vadd.f32 %v333, %v1321
        %v1323 = vpop.f32.mrb[0].mxu0
        %1324 = vmatprep.mubr.f32.mxu0 0.0
        %1325 = vmatmul.mubr.f32.gmra.mrb[0].mxu0 %v661
        %v1326 = vpop.f32.mrb[0].mxu0
        %v1327 = vadd.f32 %v333, %v1326
        %v1328 = vpop.f32.mrb[0].mxu0
        %1329 = vmatprep.mubr.f32.mxu0 0.0
        %1330 = vmatmul.mubr.f32.gmra.mrb[0].mxu0 %v664
        %v1331 = vpop.f32.mrb[0].mxu0
        %v1332 = vadd.f32 %v333, %v1331
        %v1333 = vpop.f32.mrb[0].mxu0
        %1334 = vmatprep.mubr.f32.mxu0 0.0
        %1335 = vmatmul.mubr.f32.gmra.mrb[0].mxu0 %v667
        %v1336 = vpop.f32.mrb[0].mxu0
        %v1337 = vadd.f32 %v333, %v1336
        %v1338 = vpop.f32.mrb[0].mxu0
        %1339 = vmatprep.mubr.f32.mxu0 0.0
        %1340 = vmatmul.mubr.f32.gmra.mrb[0].mxu0 %v670
        %v1341 = vpop.f32.mrb[0].mxu0
        %v1342 = vadd.f32 %v333, %v1341
        %v1343 = vpop.f32.mrb[0].mxu0
        %1344 = vmatprep.mubr.f32.mxu0 0.0
        %1345 = vmatmul.mubr.f32.gmra.mrb[0].mxu0 %v673
        %v1346 = vpop.f32.mrb[0].mxu0
        %v1347 = vadd.f32 %v333, %v1346
        %v1348 = vpop.f32.mrb[0].mxu0
        %1349 = vmatprep.mubr.f32.mxu0 0.0
        %1350 = vmatmul.mubr.f32.gmra.mrb[0].mxu0 %v676
        %v1351 = vpop.f32.mrb[0].mxu0
        %v1352 = vadd.f32 %v333, %v1351
        %v1353 = vpop.f32.mrb[0].mxu0
        %1354 = vmatprep.mubr.f32.mxu0 0.0
        %1355 = vmatmul.mubr.f32.gmra.mrb[0].mxu0 %v679
        %v1356 = vpop.f32.mrb[0].mxu0
        %v1357 = vadd.f32 %v333, %v1356
        %v1358 = vpop.f32.mrb[0].mxu0
        %1359 = vmatprep.mubr.f32.mxu0 0.0
        %1360 = vmatmul.mubr.f32.gmra.mrb[0].mxu0 %v682
        %v1361 = vpop.f32.mrb[0].mxu0
        %v1362 = vadd.f32 %v333, %v1361
        %v1363 = vpop.f32.mrb[0].mxu0
        %1364 = vmatprep.mubr.f32.mxu0 0.0
        %1365 = vmatmul.mubr.f32.gmra.mrb[0].mxu0 %v685
        %v1366 = vpop.f32.mrb[0].mxu0
        %v1367 = vadd.f32 %v333, %v1366
        %v1368 = vpop.f32.mrb[0].mxu0
        %1369 = vmatprep.mubr.f32.mxu0 0.0
        %1370 = vmatmul.mubr.f32.gmra.mrb[0].mxu0 %v688
        %v1371 = vpop.f32.mrb[0].mxu0
        %v1372 = vadd.f32 %v333, %v1371
        %v1373 = vpop.f32.mrb[0].mxu0
        %1374 = vmatprep.mubr.f32.mxu0 0.0
        %1375 = vmatmul.mubr.f32.gmra.mrb[0].mxu0 %v691
        %v1376 = vpop.f32.mrb[0].mxu0
        %v1377 = vadd.f32 %v333, %v1376
        %v1378 = vpop.f32.mrb[0].mxu0
        %1379 = vmatprep.mubr.f32.mxu0 0.0
        %1380 = vmatmul.mubr.f32.gmra.mrb[0].mxu0 %v694
        %v1381 = vpop.f32.mrb[0].mxu0
        %v1382 = vadd.f32 %v333, %v1381
        %v1383 = vpop.f32.mrb[0].mxu0
        %1384 = vmatprep.mubr.f32.mxu0 0.0
        %1385 = vmatmul.mubr.f32.gmra.mrb[0].mxu0 %v697
        %v1386 = vpop.f32.mrb[0].mxu0
        %v1387 = vadd.f32 %v333, %v1386
        %v1388 = vpop.f32.mrb[0].mxu0
        %1389 = vmatprep.mubr.f32.mxu0 0.0
        %1390 = vmatmul.mubr.f32.gmra.mrb[0].mxu0 %v700
        %v1391 = vpop.f32.mrb[0].mxu0
        %v1392 = vadd.f32 %v333, %v1391
        %v1393 = vpop.f32.mrb[0].mxu0
        %1394 = vmatprep.mubr.f32.mxu0 0.0
        %1395 = vmatmul.mubr.f32.gmra.mrb[0].mxu0 %v703
        %v1396 = vpop.f32.mrb[0].mxu0
        %v1397 = vadd.f32 %v333, %v1396
        %v1398 = vpop.f32.mrb[0].mxu0
        %1399 = vmatprep.mubr.f32.mxu0 0.0
        %1400 = vmatmul.mubr.f32.gmra.mrb[0].mxu0 %v706
        %v1401 = vpop.f32.mrb[0].mxu0
        %v1402 = vadd.f32 %v333, %v1401
        %v1403 = vpop.f32.mrb[0].mxu0
        %1404 = vmatprep.mubr.f32.mxu0 0.0
        %1405 = vmatmul.mubr.f32.gmra.mrb[0].mxu0 %v709
        %v1406 = vpop.f32.mrb[0].mxu0
        %v1407 = vadd.f32 %v333, %v1406
        %v1408 = vpop.f32.mrb[0].mxu0
        %1409 = vmatprep.mubr.f32.mxu0 0.0
        %1410 = vmatmul.mubr.f32.gmra.mrb[0].mxu0 %v712
        %v1411 = vpop.f32.mrb[0].mxu0
        %v1412 = vadd.f32 %v333, %v1411
        %v1413 = vpop.f32.mrb[0].mxu0
        %1414 = vmatprep.mubr.f32.mxu0 0.0
        %1415 = vmatmul.mubr.f32.gmra.mrb[0].mxu0 %v715
        %v1416 = vpop.f32.mrb[0].mxu0
        %v1417 = vadd.f32 %v333, %v1416
        %v1418 = vpop.f32.mrb[0].mxu0
        %1419 = vmatprep.mubr.f32.mxu0 0.0
        %1420 = vmatmul.mubr.f32.gmra.mrb[0].mxu0 %v718
        %v1421 = vpop.f32.mrb[0].mxu0
        %v1422 = vadd.f32 %v333, %v1421
        %v1423 = vpop.f32.mrb[0].mxu0
        %1424 = vdwg.mxu0
        %vm1425 = vcmask 261120
        %1426 = vst.msk [vmem:[%s172] sm:$0xff] %vm1425, %v787
        %1427 = vst.msk [vmem:[%s172 + $0x8] sm:$0xff] %vm1425, %v792
        %1428 = vst.msk [vmem:[%s172 + $0x10] sm:$0xff] %vm1425, %v797
        %1429 = vst.msk [vmem:[%s172 + $0x18] sm:$0xff] %vm1425, %v802
        %1430 = vst.msk [vmem:[%s172 + $0x20] sm:$0xff] %vm1425, %v807
        %1431 = vst.msk [vmem:[%s172 + $0x28] sm:$0xff] %vm1425, %v812
        %1432 = vst.msk [vmem:[%s172 + $0x30] sm:$0xff] %vm1425, %v817
        %1433 = vst.msk [vmem:[%s172 + $0x38] sm:$0xff] %vm1425, %v822
        %1434 = vst.msk [vmem:[%s172 + $0x40] sm:$0xff] %vm1425, %v827
        %1435 = vst.msk [vmem:[%s172 + $0x48] sm:$0xff] %vm1425, %v832
        %1436 = vst.msk [vmem:[%s172 + $0x50] sm:$0xff] %vm1425, %v837
        %1437 = vst.msk [vmem:[%s172 + $0x58] sm:$0xff] %vm1425, %v842
        %1438 = vst.msk [vmem:[%s172 + $0x60] sm:$0xff] %vm1425, %v847
        %1439 = vst.msk [vmem:[%s172 + $0x68] sm:$0xff] %vm1425, %v852
        %1440 = vst.msk [vmem:[%s172 + $0x70] sm:$0xff] %vm1425, %v857
        %1441 = vst.msk [vmem:[%s172 + $0x78] sm:$0xff] %vm1425, %v862
        %1442 = vst.msk [vmem:[%s172 + $0x80] sm:$0xff] %vm1425, %v867
        %1443 = vst.msk [vmem:[%s172 + $0x88] sm:$0xff] %vm1425, %v872
        %1444 = vst.msk [vmem:[%s172 + $0x90] sm:$0xff] %vm1425, %v877
        %1445 = vst.msk [vmem:[%s172 + $0x98] sm:$0xff] %vm1425, %v882
        %1446 = vst.msk [vmem:[%s172 + $0xa0] sm:$0xff] %vm1425, %v887
        %1447 = vst.msk [vmem:[%s172 + $0xa8] sm:$0xff] %vm1425, %v892
        %1448 = vst.msk [vmem:[%s172 + $0xb0] sm:$0xff] %vm1425, %v897
        %1449 = vst.msk [vmem:[%s172 + $0xb8] sm:$0xff] %vm1425, %v902
        %1450 = vst.msk [vmem:[%s172 + $0xc0] sm:$0xff] %vm1425, %v907
        %1451 = vst.msk [vmem:[%s172 + $0xc8] sm:$0xff] %vm1425, %v912
        %1452 = vst.msk [vmem:[%s172 + $0xd0] sm:$0xff] %vm1425, %v917
        %1453 = vst.msk [vmem:[%s172 + $0xd8] sm:$0xff] %vm1425, %v922
        %1454 = vst.msk [vmem:[%s172 + $0xe0] sm:$0xff] %vm1425, %v927
        %1455 = vst.msk [vmem:[%s172 + $0xe8] sm:$0xff] %vm1425, %v932
        %1456 = vst.msk [vmem:[%s172 + $0xf0] sm:$0xff] %vm1425, %v937
        %1457 = vst.msk [vmem:[%s172 + $0xf8] sm:$0xff] %vm1425, %v942
        %1458 = vst.msk [vmem:[%s172 + $0x100] sm:$0xff] %vm1425, %v947
        %1459 = vst.msk [vmem:[%s172 + $0x108] sm:$0xff] %vm1425, %v952
        %1460 = vst.msk [vmem:[%s172 + $0x110] sm:$0xff] %vm1425, %v957
        %1461 = vst.msk [vmem:[%s172 + $0x118] sm:$0xff] %vm1425, %v962
        %1462 = vst.msk [vmem:[%s172 + $0x120] sm:$0xff] %vm1425, %v967
        %1463 = vst.msk [vmem:[%s172 + $0x128] sm:$0xff] %vm1425, %v972
        %1464 = vst.msk [vmem:[%s172 + $0x130] sm:$0xff] %vm1425, %v977
        %1465 = vst.msk [vmem:[%s172 + $0x138] sm:$0xff] %vm1425, %v982
        %1466 = vst.msk [vmem:[%s172 + $0x140] sm:$0xff] %vm1425, %v987
        %1467 = vst.msk [vmem:[%s172 + $0x148] sm:$0xff] %vm1425, %v992
        %1468 = vst.msk [vmem:[%s172 + $0x150] sm:$0xff] %vm1425, %v997
        %1469 = vst.msk [vmem:[%s172 + $0x158] sm:$0xff] %vm1425, %v1002
        %1470 = vst.msk [vmem:[%s172 + $0x160] sm:$0xff] %vm1425, %v1007
        %1471 = vst.msk [vmem:[%s172 + $0x168] sm:$0xff] %vm1425, %v1012
        %1472 = vst.msk [vmem:[%s172 + $0x170] sm:$0xff] %vm1425, %v1017
        %1473 = vst.msk [vmem:[%s172 + $0x178] sm:$0xff] %vm1425, %v1022
        %1474 = vst.msk [vmem:[%s172 + $0x180] sm:$0xff] %vm1425, %v1027
        %1475 = vst.msk [vmem:[%s172 + $0x188] sm:$0xff] %vm1425, %v1032
        %1476 = vst.msk [vmem:[%s172 + $0x190] sm:$0xff] %vm1425, %v1037
        %1477 = vst.msk [vmem:[%s172 + $0x198] sm:$0xff] %vm1425, %v1042
        %1478 = vst.msk [vmem:[%s172 + $0x1a0] sm:$0xff] %vm1425, %v1047
        %1479 = vst.msk [vmem:[%s172 + $0x1a8] sm:$0xff] %vm1425, %v1052
        %1480 = vst.msk [vmem:[%s172 + $0x1b0] sm:$0xff] %vm1425, %v1057
        %1481 = vst.msk [vmem:[%s172 + $0x1b8] sm:$0xff] %vm1425, %v1062
        %1482 = vst.msk [vmem:[%s172 + $0x1c0] sm:$0xff] %vm1425, %v1067
        %1483 = vst.msk [vmem:[%s172 + $0x1c8] sm:$0xff] %vm1425, %v1072
        %1484 = vst.msk [vmem:[%s172 + $0x1d0] sm:$0xff] %vm1425, %v1077
        %1485 = vst.msk [vmem:[%s172 + $0x1d8] sm:$0xff] %vm1425, %v1082
        %1486 = vst.msk [vmem:[%s172 + $0x1e0] sm:$0xff] %vm1425, %v1087
        %1487 = vst.msk [vmem:[%s172 + $0x1e8] sm:$0xff] %vm1425, %v1092
        %1488 = vst.msk [vmem:[%s172 + $0x1f0] sm:$0xff] %vm1425, %v1097
        %1489 = vst.msk [vmem:[%s172 + $0x1f8] sm:$0xff] %vm1425, %v1102
        %1490 = vst.msk [vmem:[%s172 + $0x200] sm:$0xff] %vm1425, %v1107
        %1491 = vst.msk [vmem:[%s172 + $0x208] sm:$0xff] %vm1425, %v1112
        %1492 = vst.msk [vmem:[%s172 + $0x210] sm:$0xff] %vm1425, %v1117
        %1493 = vst.msk [vmem:[%s172 + $0x218] sm:$0xff] %vm1425, %v1122
        %1494 = vst.msk [vmem:[%s172 + $0x220] sm:$0xff] %vm1425, %v1127
        %1495 = vst.msk [vmem:[%s172 + $0x228] sm:$0xff] %vm1425, %v1132
        %1496 = vst.msk [vmem:[%s172 + $0x230] sm:$0xff] %vm1425, %v1137
        %1497 = vst.msk [vmem:[%s172 + $0x238] sm:$0xff] %vm1425, %v1142
        %1498 = vst.msk [vmem:[%s172 + $0x240] sm:$0xff] %vm1425, %v1147
        %1499 = vst.msk [vmem:[%s172 + $0x248] sm:$0xff] %vm1425, %v1152
        %1500 = vst.msk [vmem:[%s172 + $0x250] sm:$0xff] %vm1425, %v1157
        %1501 = vst.msk [vmem:[%s172 + $0x258] sm:$0xff] %vm1425, %v1162
        %1502 = vst.msk [vmem:[%s172 + $0x260] sm:$0xff] %vm1425, %v1167
        %1503 = vst.msk [vmem:[%s172 + $0x268] sm:$0xff] %vm1425, %v1172
        %1504 = vst.msk [vmem:[%s172 + $0x270] sm:$0xff] %vm1425, %v1177
        %1505 = vst.msk [vmem:[%s172 + $0x278] sm:$0xff] %vm1425, %v1182
        %1506 = vst.msk [vmem:[%s172 + $0x280] sm:$0xff] %vm1425, %v1187
        %1507 = vst.msk [vmem:[%s172 + $0x288] sm:$0xff] %vm1425, %v1192
        %1508 = vst.msk [vmem:[%s172 + $0x290] sm:$0xff] %vm1425, %v1197
        %1509 = vst.msk [vmem:[%s172 + $0x298] sm:$0xff] %vm1425, %v1202
        %1510 = vst.msk [vmem:[%s172 + $0x2a0] sm:$0xff] %vm1425, %v1207
        %1511 = vst.msk [vmem:[%s172 + $0x2a8] sm:$0xff] %vm1425, %v1212
        %1512 = vst.msk [vmem:[%s172 + $0x2b0] sm:$0xff] %vm1425, %v1217
        %1513 = vst.msk [vmem:[%s172 + $0x2b8] sm:$0xff] %vm1425, %v1222
        %1514 = vst.msk [vmem:[%s172 + $0x2c0] sm:$0xff] %vm1425, %v1227
        %1515 = vst.msk [vmem:[%s172 + $0x2c8] sm:$0xff] %vm1425, %v1232
        %1516 = vst.msk [vmem:[%s172 + $0x2d0] sm:$0xff] %vm1425, %v1237
        %1517 = vst.msk [vmem:[%s172 + $0x2d8] sm:$0xff] %vm1425, %v1242
        %1518 = vst.msk [vmem:[%s172 + $0x2e0] sm:$0xff] %vm1425, %v1247
        %1519 = vst.msk [vmem:[%s172 + $0x2e8] sm:$0xff] %vm1425, %v1252
        %1520 = vst.msk [vmem:[%s172 + $0x2f0] sm:$0xff] %vm1425, %v1257
        %1521 = vst.msk [vmem:[%s172 + $0x2f8] sm:$0xff] %vm1425, %v1262
        %1522 = vst.msk [vmem:[%s172 + $0x300] sm:$0xff] %vm1425, %v1267
        %1523 = vst.msk [vmem:[%s172 + $0x308] sm:$0xff] %vm1425, %v1272
        %1524 = vst.msk [vmem:[%s172 + $0x310] sm:$0xff] %vm1425, %v1277
        %1525 = vst.msk [vmem:[%s172 + $0x318] sm:$0xff] %vm1425, %v1282
        %1526 = vst.msk [vmem:[%s172 + $0x320] sm:$0xff] %vm1425, %v1287
        %1527 = vst.msk [vmem:[%s172 + $0x328] sm:$0xff] %vm1425, %v1292
        %1528 = vst.msk [vmem:[%s172 + $0x330] sm:$0xff] %vm1425, %v1297
        %1529 = vst.msk [vmem:[%s172 + $0x338] sm:$0xff] %vm1425, %v1302
        %1530 = vst.msk [vmem:[%s172 + $0x340] sm:$0xff] %vm1425, %v1307
        %1531 = vst.msk [vmem:[%s172 + $0x348] sm:$0xff] %vm1425, %v1312
        %1532 = vst.msk [vmem:[%s172 + $0x350] sm:$0xff] %vm1425, %v1317
        %1533 = vst.msk [vmem:[%s172 + $0x358] sm:$0xff] %vm1425, %v1322
        %1534 = vst.msk [vmem:[%s172 + $0x360] sm:$0xff] %vm1425, %v1327
        %1535 = vst.msk [vmem:[%s172 + $0x368] sm:$0xff] %vm1425, %v1332
        %1536 = vst.msk [vmem:[%s172 + $0x370] sm:$0xff] %vm1425, %v1337
        %1537 = vst.msk [vmem:[%s172 + $0x378] sm:$0xff] %vm1425, %v1342
        %1538 = vst.msk [vmem:[%s172 + $0x380] sm:$0xff] %vm1425, %v1347
        %1539 = vst.msk [vmem:[%s172 + $0x388] sm:$0xff] %vm1425, %v1352
        %1540 = vst.msk [vmem:[%s172 + $0x390] sm:$0xff] %vm1425, %v1357
        %1541 = vst.msk [vmem:[%s172 + $0x398] sm:$0xff] %vm1425, %v1362
        %1542 = vst.msk [vmem:[%s172 + $0x3a0] sm:$0xff] %vm1425, %v1367
        %1543 = vst.msk [vmem:[%s172 + $0x3a8] sm:$0xff] %vm1425, %v1372
        %1544 = vst.msk [vmem:[%s172 + $0x3b0] sm:$0xff] %vm1425, %v1377
        %1545 = vst.msk [vmem:[%s172 + $0x3b8] sm:$0xff] %vm1425, %v1382
        %1546 = vst.msk [vmem:[%s172 + $0x3c0] sm:$0xff] %vm1425, %v1387
        %1547 = vst.msk [vmem:[%s172 + $0x3c8] sm:$0xff] %vm1425, %v1392
        %1548 = vst.msk [vmem:[%s172 + $0x3d0] sm:$0xff] %vm1425, %v1397
        %1549 = vst.msk [vmem:[%s172 + $0x3d8] sm:$0xff] %vm1425, %v1402
        %1550 = vst.msk [vmem:[%s172 + $0x3e0] sm:$0xff] %vm1425, %v1407
        %1551 = vst.msk [vmem:[%s172 + $0x3e8] sm:$0xff] %vm1425, %v1412
        %1552 = vst.msk [vmem:[%s172 + $0x3f0] sm:$0xff] %vm1425, %v1417
        %1553 = vst.msk [vmem:[%s172 + $0x3f8] sm:$0xff] %vm1425, %v1422
        %s1554 = sand.u32 %s90, 1
        %s1555 = sand.u32 %s90, 1
        %s1556 = smul.addr %s1555, 1024
        %s1557 = scalar_lea.vmem [#allocation2], %s1556
        // Predicated region
        $region33: #{tpu_custom_call.1} parent=31 // pred_check
          %p1558 = pneg %p100
        $region34: #{tpu_custom_call.1} parent=31 // pred_check_branch
          %1560 = sbr.rel (%p1558) target = $region36
        $region35: #{tpu_custom_call.1} parent=31 // pred_region
          %s1561 = smul.u32 128, %s14
          %s1562 = ssub.s32 513, %s1561
          %p1563 = scmp.lt.s32.totalorder %s1562, 128
          %s1564 = scalar_select %p1563, %s1562, 128
          %s1565 = smul.u32 128, %s1564
          %p1566 = scmp.ne.s32.totalorder 0, %s1565
          %s1567 = smul.addr %s1561, 8
          %s1568 = scalar_lea.vmem %s3, %s1567
          // Predicated region
          $region37: #{tpu_custom_call.1} parent=35 // pred_check
            %p1569 = pneg %p1566
          $region38: #{tpu_custom_call.1} parent=35 // pred_check_branch
            %1571 = sbr.rel (%p1569) target = $region40
          $region39: #{tpu_custom_call.1} parent=35 // pred_region
            // Predicated region
            $region41: #{tpu_custom_call.1} parent=39 // pred_check
              _
            $region42: #{tpu_custom_call.1} parent=39 // pred_check_branch
              %1573 = sbr.rel (0) target = $region44
            $region43: #{tpu_custom_call.1} parent=39 // pred_region
              // Predicated region
              $region63: #{tpu_custom_call.1} parent=43 // pred_check
                _
              $region64: #{tpu_custom_call.1} parent=43 // pred_check_branch
                %1748 = sbr.rel (0) target = $region66
              $region65: #{tpu_custom_call.1} parent=43 // pred_region
                %s1749 = sshrl.u32 %s1564, 6
                // While loop
                $region67: #{tpu_custom_call.1} parent=65 // loop_pre_header
                  _
                $region68: #{tpu_custom_call.1} parent=65 // loop_header
                  %s1751 = sphi 0, %s1753
                  %p1752 = scmp.ge.s32.totalorder %s1751, %s1749
                  %s1756 = sphi 0, %s1889
                  %s1757 = sphi %s1557, %s1892
                  %s1758 = sphi %s1568, %s1893
                $region69: #{tpu_custom_call.1} parent=65 // loop_header_branch
                  %1755 = sbr.rel (%p1752) target = $region73
                $region70: #{tpu_custom_call.1} parent=65 // loop_body
                  %v1759 = vld [vmem:[%s1757] sm:$0xff]
                  %1760 = vst [vmem:[%s1758] sm:$0xff] %v1759
                  %v1761 = vld [vmem:[%s1757 + $0x8] sm:$0xff]
                  %1762 = vst [vmem:[%s1758 + $0x8] sm:$0xff] %v1761
                  %v1763 = vld [vmem:[%s1757 + $0x10] sm:$0xff]
                  %1764 = vst [vmem:[%s1758 + $0x10] sm:$0xff] %v1763
                  %v1765 = vld [vmem:[%s1757 + $0x18] sm:$0xff]
                  %1766 = vst [vmem:[%s1758 + $0x18] sm:$0xff] %v1765
                  %v1767 = vld [vmem:[%s1757 + $0x20] sm:$0xff]
                  %1768 = vst [vmem:[%s1758 + $0x20] sm:$0xff] %v1767
                  %v1769 = vld [vmem:[%s1757 + $0x28] sm:$0xff]
                  %1770 = vst [vmem:[%s1758 + $0x28] sm:$0xff] %v1769
                  %v1771 = vld [vmem:[%s1757 + $0x30] sm:$0xff]
                  %1772 = vst [vmem:[%s1758 + $0x30] sm:$0xff] %v1771
                  %v1773 = vld [vmem:[%s1757 + $0x38] sm:$0xff]
                  %1774 = vst [vmem:[%s1758 + $0x38] sm:$0xff] %v1773
                  %v1775 = vld [vmem:[%s1757 + $0x40] sm:$0xff]
                  %1776 = vst [vmem:[%s1758 + $0x40] sm:$0xff] %v1775
                  %v1777 = vld [vmem:[%s1757 + $0x48] sm:$0xff]
                  %1778 = vst [vmem:[%s1758 + $0x48] sm:$0xff] %v1777
                  %v1779 = vld [vmem:[%s1757 + $0x50] sm:$0xff]
                  %1780 = vst [vmem:[%s1758 + $0x50] sm:$0xff] %v1779
                  %v1781 = vld [vmem:[%s1757 + $0x58] sm:$0xff]
                  %1782 = vst [vmem:[%s1758 + $0x58] sm:$0xff] %v1781
                  %v1783 = vld [vmem:[%s1757 + $0x60] sm:$0xff]
                  %1784 = vst [vmem:[%s1758 + $0x60] sm:$0xff] %v1783
                  %v1785 = vld [vmem:[%s1757 + $0x68] sm:$0xff]
                  %1786 = vst [vmem:[%s1758 + $0x68] sm:$0xff] %v1785
                  %v1787 = vld [vmem:[%s1757 + $0x70] sm:$0xff]
                  %1788 = vst [vmem:[%s1758 + $0x70] sm:$0xff] %v1787
                  %v1789 = vld [vmem:[%s1757 + $0x78] sm:$0xff]
                  %1790 = vst [vmem:[%s1758 + $0x78] sm:$0xff] %v1789
                  %v1791 = vld [vmem:[%s1757 + $0x80] sm:$0xff]
                  %1792 = vst [vmem:[%s1758 + $0x80] sm:$0xff] %v1791
                  %v1793 = vld [vmem:[%s1757 + $0x88] sm:$0xff]
                  %1794 = vst [vmem:[%s1758 + $0x88] sm:$0xff] %v1793
                  %v1795 = vld [vmem:[%s1757 + $0x90] sm:$0xff]
                  %1796 = vst [vmem:[%s1758 + $0x90] sm:$0xff] %v1795
                  %v1797 = vld [vmem:[%s1757 + $0x98] sm:$0xff]
                  %1798 = vst [vmem:[%s1758 + $0x98] sm:$0xff] %v1797
                  %v1799 = vld [vmem:[%s1757 + $0xa0] sm:$0xff]
                  %1800 = vst [vmem:[%s1758 + $0xa0] sm:$0xff] %v1799
                  %v1801 = vld [vmem:[%s1757 + $0xa8] sm:$0xff]
                  %1802 = vst [vmem:[%s1758 + $0xa8] sm:$0xff] %v1801
                  %v1803 = vld [vmem:[%s1757 + $0xb0] sm:$0xff]
                  %1804 = vst [vmem:[%s1758 + $0xb0] sm:$0xff] %v1803
                  %v1805 = vld [vmem:[%s1757 + $0xb8] sm:$0xff]
                  %1806 = vst [vmem:[%s1758 + $0xb8] sm:$0xff] %v1805
                  %v1807 = vld [vmem:[%s1757 + $0xc0] sm:$0xff]
                  %1808 = vst [vmem:[%s1758 + $0xc0] sm:$0xff] %v1807
                  %v1809 = vld [vmem:[%s1757 + $0xc8] sm:$0xff]
                  %1810 = vst [vmem:[%s1758 + $0xc8] sm:$0xff] %v1809
                  %v1811 = vld [vmem:[%s1757 + $0xd0] sm:$0xff]
                  %1812 = vst [vmem:[%s1758 + $0xd0] sm:$0xff] %v1811
                  %v1813 = vld [vmem:[%s1757 + $0xd8] sm:$0xff]
                  %1814 = vst [vmem:[%s1758 + $0xd8] sm:$0xff] %v1813
                  %v1815 = vld [vmem:[%s1757 + $0xe0] sm:$0xff]
                  %1816 = vst [vmem:[%s1758 + $0xe0] sm:$0xff] %v1815
                  %v1817 = vld [vmem:[%s1757 + $0xe8] sm:$0xff]
                  %1818 = vst [vmem:[%s1758 + $0xe8] sm:$0xff] %v1817
                  %v1819 = vld [vmem:[%s1757 + $0xf0] sm:$0xff]
                  %1820 = vst [vmem:[%s1758 + $0xf0] sm:$0xff] %v1819
                  %v1821 = vld [vmem:[%s1757 + $0xf8] sm:$0xff]
                  %1822 = vst [vmem:[%s1758 + $0xf8] sm:$0xff] %v1821
                  %v1823 = vld [vmem:[%s1757 + $0x100] sm:$0xff]
                  %1824 = vst [vmem:[%s1758 + $0x100] sm:$0xff] %v1823
                  %v1825 = vld [vmem:[%s1757 + $0x108] sm:$0xff]
                  %1826 = vst [vmem:[%s1758 + $0x108] sm:$0xff] %v1825
                  %v1827 = vld [vmem:[%s1757 + $0x110] sm:$0xff]
                  %1828 = vst [vmem:[%s1758 + $0x110] sm:$0xff] %v1827
                  %v1829 = vld [vmem:[%s1757 + $0x118] sm:$0xff]
                  %1830 = vst [vmem:[%s1758 + $0x118] sm:$0xff] %v1829
                  %v1831 = vld [vmem:[%s1757 + $0x120] sm:$0xff]
                  %1832 = vst [vmem:[%s1758 + $0x120] sm:$0xff] %v1831
                  %v1833 = vld [vmem:[%s1757 + $0x128] sm:$0xff]
                  %1834 = vst [vmem:[%s1758 + $0x128] sm:$0xff] %v1833
                  %v1835 = vld [vmem:[%s1757 + $0x130] sm:$0xff]
                  %1836 = vst [vmem:[%s1758 + $0x130] sm:$0xff] %v1835
                  %v1837 = vld [vmem:[%s1757 + $0x138] sm:$0xff]
                  %1838 = vst [vmem:[%s1758 + $0x138] sm:$0xff] %v1837
                  %v1839 = vld [vmem:[%s1757 + $0x140] sm:$0xff]
                  %1840 = vst [vmem:[%s1758 + $0x140] sm:$0xff] %v1839
                  %v1841 = vld [vmem:[%s1757 + $0x148] sm:$0xff]
                  %1842 = vst [vmem:[%s1758 + $0x148] sm:$0xff] %v1841
                  %v1843 = vld [vmem:[%s1757 + $0x150] sm:$0xff]
                  %1844 = vst [vmem:[%s1758 + $0x150] sm:$0xff] %v1843
                  %v1845 = vld [vmem:[%s1757 + $0x158] sm:$0xff]
                  %1846 = vst [vmem:[%s1758 + $0x158] sm:$0xff] %v1845
                  %v1847 = vld [vmem:[%s1757 + $0x160] sm:$0xff]
                  %1848 = vst [vmem:[%s1758 + $0x160] sm:$0xff] %v1847
                  %v1849 = vld [vmem:[%s1757 + $0x168] sm:$0xff]
                  %1850 = vst [vmem:[%s1758 + $0x168] sm:$0xff] %v1849
                  %v1851 = vld [vmem:[%s1757 + $0x170] sm:$0xff]
                  %1852 = vst [vmem:[%s1758 + $0x170] sm:$0xff] %v1851
                  %v1853 = vld [vmem:[%s1757 + $0x178] sm:$0xff]
                  %1854 = vst [vmem:[%s1758 + $0x178] sm:$0xff] %v1853
                  %v1855 = vld [vmem:[%s1757 + $0x180] sm:$0xff]
                  %1856 = vst [vmem:[%s1758 + $0x180] sm:$0xff] %v1855
                  %v1857 = vld [vmem:[%s1757 + $0x188] sm:$0xff]
                  %1858 = vst [vmem:[%s1758 + $0x188] sm:$0xff] %v1857
                  %v1859 = vld [vmem:[%s1757 + $0x190] sm:$0xff]
                  %1860 = vst [vmem:[%s1758 + $0x190] sm:$0xff] %v1859
                  %v1861 = vld [vmem:[%s1757 + $0x198] sm:$0xff]
                  %1862 = vst [vmem:[%s1758 + $0x198] sm:$0xff] %v1861
                  %v1863 = vld [vmem:[%s1757 + $0x1a0] sm:$0xff]
                  %1864 = vst [vmem:[%s1758 + $0x1a0] sm:$0xff] %v1863
                  %v1865 = vld [vmem:[%s1757 + $0x1a8] sm:$0xff]
                  %1866 = vst [vmem:[%s1758 + $0x1a8] sm:$0xff] %v1865
                  %v1867 = vld [vmem:[%s1757 + $0x1b0] sm:$0xff]
                  %1868 = vst [vmem:[%s1758 + $0x1b0] sm:$0xff] %v1867
                  %v1869 = vld [vmem:[%s1757 + $0x1b8] sm:$0xff]
                  %1870 = vst [vmem:[%s1758 + $0x1b8] sm:$0xff] %v1869
                  %v1871 = vld [vmem:[%s1757 + $0x1c0] sm:$0xff]
                  %1872 = vst [vmem:[%s1758 + $0x1c0] sm:$0xff] %v1871
                  %v1873 = vld [vmem:[%s1757 + $0x1c8] sm:$0xff]
                  %1874 = vst [vmem:[%s1758 + $0x1c8] sm:$0xff] %v1873
                  %v1875 = vld [vmem:[%s1757 + $0x1d0] sm:$0xff]
                  %1876 = vst [vmem:[%s1758 + $0x1d0] sm:$0xff] %v1875
                  %v1877 = vld [vmem:[%s1757 + $0x1d8] sm:$0xff]
                  %1878 = vst [vmem:[%s1758 + $0x1d8] sm:$0xff] %v1877
                  %v1879 = vld [vmem:[%s1757 + $0x1e0] sm:$0xff]
                  %1880 = vst [vmem:[%s1758 + $0x1e0] sm:$0xff] %v1879
                  %v1881 = vld [vmem:[%s1757 + $0x1e8] sm:$0xff]
                  %1882 = vst [vmem:[%s1758 + $0x1e8] sm:$0xff] %v1881
                  %v1883 = vld [vmem:[%s1757 + $0x1f0] sm:$0xff]
                  %1884 = vst [vmem:[%s1758 + $0x1f0] sm:$0xff] %v1883
                  %v1885 = vld [vmem:[%s1757 + $0x1f8] sm:$0xff]
                  %1886 = vst [vmem:[%s1758 + $0x1f8] sm:$0xff] %v1885
                  %s1887 = sadd.s32 1, %s1756
                  %p1888 = scmp.ge.s32.totalorder %s1887, %s1749
                  %s1889 = scalar_select %p1888, 0, %s1887
                  %s1890 = smul.u32 %s1889, 512
                  %s1891 = smul.u32 %s1889, 512
                  %s1892 = scalar_lea.vmem %s1557, %s1890 [#allocation2]
                  %s1893 = scalar_lea.vmem %s1568, %s1891
                $region71: #{tpu_custom_call.1} parent=65 // loop_footer
                  %s1753 = sadd.s32 %s1751, 1
                $region72: #{tpu_custom_call.1} parent=65 // loop_footer_branch
                  %1750 = sbr.rel target = $region68
                $region73: #{tpu_custom_call.1} parent=65 // loop_exit
                  _
                %s1894 = sshrl.u32 %s1564, 6
                %s1895 = sand.u32 %s1564, 63
                %s1896 = smul.u32 %s1894, 64
                %s1897 = smul.u32 8, %s1896
                %s1898 = scalar_lea.vmem %s1557, %s1897 [#allocation2]
                %s1899 = smul.u32 8, %s1896
                %s1900 = scalar_lea.vmem %s1568, %s1899
                // While loop
                $region74: #{tpu_custom_call.1} parent=65 // loop_pre_header
                  _
                $region75: #{tpu_custom_call.1} parent=65 // loop_header
                  %s1902 = sphi 0, %s1904
                  %p1903 = scmp.ge.s32.totalorder %s1902, %s1895
                  %s1907 = sphi 0, %s1914
                  %s1908 = sphi %s1898, %s1917
                  %s1909 = sphi %s1900, %s1918
                $region76: #{tpu_custom_call.1} parent=65 // loop_header_branch
                  %1906 = sbr.rel (%p1903) target = $region80
                $region77: #{tpu_custom_call.1} parent=65 // loop_body
                  %v1910 = vld [vmem:[%s1908] sm:$0xff]
                  %1911 = vst [vmem:[%s1909] sm:$0xff] %v1910
                  %s1912 = sadd.s32 1, %s1907
                  %p1913 = scmp.ge.s32.totalorder %s1912, %s1895
                  %s1914 = scalar_select %p1913, 0, %s1912
                  %s1915 = smul.u32 %s1914, 8
                  %s1916 = smul.u32 %s1914, 8
                  %s1917 = scalar_lea.vmem %s1898, %s1915 [#allocation2]
                  %s1918 = scalar_lea.vmem %s1900, %s1916
                $region78: #{tpu_custom_call.1} parent=65 // loop_footer
                  %s1904 = sadd.s32 %s1902, 1
                $region79: #{tpu_custom_call.1} parent=65 // loop_footer_branch
                  %1901 = sbr.rel target = $region75
                $region80: #{tpu_custom_call.1} parent=65 // loop_exit
                  _
              $region66: #{tpu_custom_call.1} parent=43 // pred_fallthru
                _
              // Predicated region
              $region81: #{tpu_custom_call.1} parent=43 // pred_check
                _
              $region82: #{tpu_custom_call.1} parent=43 // pred_check_branch
                %1920 = sbr.rel target = $region84
              $region83: #{tpu_custom_call.1} parent=43 // pred_region
                _
              $region84: #{tpu_custom_call.1} parent=43 // pred_fallthru
                _
            $region44: #{tpu_custom_call.1} parent=39 // pred_fallthru
              _
            // Predicated region
            $region45: #{tpu_custom_call.1} parent=39 // pred_check
              _
            $region46: #{tpu_custom_call.1} parent=39 // pred_check_branch
              %1575 = sbr.rel target = $region48
            $region47: #{tpu_custom_call.1} parent=39 // pred_region
              %s1577 = sshrl.u32 %s1564, 6
              // While loop
              $region49: #{tpu_custom_call.1} parent=47 // loop_pre_header
                _
              $region50: #{tpu_custom_call.1} parent=47 // loop_header
                %s1579 = sphi 0, %s1581
                %p1580 = scmp.ge.s32.totalorder %s1579, %s1577
                %s1584 = sphi 0, %s1717
                %s1585 = sphi %s1557, %s1720
                %s1586 = sphi %s1568, %s1721
              $region51: #{tpu_custom_call.1} parent=47 // loop_header_branch
                %1583 = sbr.rel (%p1580) target = $region55
              $region52: #{tpu_custom_call.1} parent=47 // loop_body
                %v1587 = vld [vmem:[%s1585] sm:$0xff]
                %1588 = vst [vmem:[%s1586] sm:$0xff] %v1587
                %v1589 = vld [vmem:[%s1585 + $0x8] sm:$0xff]
                %1590 = vst [vmem:[%s1586 + $0x8] sm:$0xff] %v1589
                %v1591 = vld [vmem:[%s1585 + $0x10] sm:$0xff]
                %1592 = vst [vmem:[%s1586 + $0x10] sm:$0xff] %v1591
                %v1593 = vld [vmem:[%s1585 + $0x18] sm:$0xff]
                %1594 = vst [vmem:[%s1586 + $0x18] sm:$0xff] %v1593
                %v1595 = vld [vmem:[%s1585 + $0x20] sm:$0xff]
                %1596 = vst [vmem:[%s1586 + $0x20] sm:$0xff] %v1595
                %v1597 = vld [vmem:[%s1585 + $0x28] sm:$0xff]
                %1598 = vst [vmem:[%s1586 + $0x28] sm:$0xff] %v1597
                %v1599 = vld [vmem:[%s1585 + $0x30] sm:$0xff]
                %1600 = vst [vmem:[%s1586 + $0x30] sm:$0xff] %v1599
                %v1601 = vld [vmem:[%s1585 + $0x38] sm:$0xff]
                %1602 = vst [vmem:[%s1586 + $0x38] sm:$0xff] %v1601
                %v1603 = vld [vmem:[%s1585 + $0x40] sm:$0xff]
                %1604 = vst [vmem:[%s1586 + $0x40] sm:$0xff] %v1603
                %v1605 = vld [vmem:[%s1585 + $0x48] sm:$0xff]
                %1606 = vst [vmem:[%s1586 + $0x48] sm:$0xff] %v1605
                %v1607 = vld [vmem:[%s1585 + $0x50] sm:$0xff]
                %1608 = vst [vmem:[%s1586 + $0x50] sm:$0xff] %v1607
                %v1609 = vld [vmem:[%s1585 + $0x58] sm:$0xff]
                %1610 = vst [vmem:[%s1586 + $0x58] sm:$0xff] %v1609
                %v1611 = vld [vmem:[%s1585 + $0x60] sm:$0xff]
                %1612 = vst [vmem:[%s1586 + $0x60] sm:$0xff] %v1611
                %v1613 = vld [vmem:[%s1585 + $0x68] sm:$0xff]
                %1614 = vst [vmem:[%s1586 + $0x68] sm:$0xff] %v1613
                %v1615 = vld [vmem:[%s1585 + $0x70] sm:$0xff]
                %1616 = vst [vmem:[%s1586 + $0x70] sm:$0xff] %v1615
                %v1617 = vld [vmem:[%s1585 + $0x78] sm:$0xff]
                %1618 = vst [vmem:[%s1586 + $0x78] sm:$0xff] %v1617
                %v1619 = vld [vmem:[%s1585 + $0x80] sm:$0xff]
                %1620 = vst [vmem:[%s1586 + $0x80] sm:$0xff] %v1619
                %v1621 = vld [vmem:[%s1585 + $0x88] sm:$0xff]
                %1622 = vst [vmem:[%s1586 + $0x88] sm:$0xff] %v1621
                %v1623 = vld [vmem:[%s1585 + $0x90] sm:$0xff]
                %1624 = vst [vmem:[%s1586 + $0x90] sm:$0xff] %v1623
                %v1625 = vld [vmem:[%s1585 + $0x98] sm:$0xff]
                %1626 = vst [vmem:[%s1586 + $0x98] sm:$0xff] %v1625
                %v1627 = vld [vmem:[%s1585 + $0xa0] sm:$0xff]
                %1628 = vst [vmem:[%s1586 + $0xa0] sm:$0xff] %v1627
                %v1629 = vld [vmem:[%s1585 + $0xa8] sm:$0xff]
                %1630 = vst [vmem:[%s1586 + $0xa8] sm:$0xff] %v1629
                %v1631 = vld [vmem:[%s1585 + $0xb0] sm:$0xff]
                %1632 = vst [vmem:[%s1586 + $0xb0] sm:$0xff] %v1631
                %v1633 = vld [vmem:[%s1585 + $0xb8] sm:$0xff]
                %1634 = vst [vmem:[%s1586 + $0xb8] sm:$0xff] %v1633
                %v1635 = vld [vmem:[%s1585 + $0xc0] sm:$0xff]
                %1636 = vst [vmem:[%s1586 + $0xc0] sm:$0xff] %v1635
                %v1637 = vld [vmem:[%s1585 + $0xc8] sm:$0xff]
                %1638 = vst [vmem:[%s1586 + $0xc8] sm:$0xff] %v1637
                %v1639 = vld [vmem:[%s1585 + $0xd0] sm:$0xff]
                %1640 = vst [vmem:[%s1586 + $0xd0] sm:$0xff] %v1639
                %v1641 = vld [vmem:[%s1585 + $0xd8] sm:$0xff]
                %1642 = vst [vmem:[%s1586 + $0xd8] sm:$0xff] %v1641
                %v1643 = vld [vmem:[%s1585 + $0xe0] sm:$0xff]
                %1644 = vst [vmem:[%s1586 + $0xe0] sm:$0xff] %v1643
                %v1645 = vld [vmem:[%s1585 + $0xe8] sm:$0xff]
                %1646 = vst [vmem:[%s1586 + $0xe8] sm:$0xff] %v1645
                %v1647 = vld [vmem:[%s1585 + $0xf0] sm:$0xff]
                %1648 = vst [vmem:[%s1586 + $0xf0] sm:$0xff] %v1647
                %v1649 = vld [vmem:[%s1585 + $0xf8] sm:$0xff]
                %1650 = vst [vmem:[%s1586 + $0xf8] sm:$0xff] %v1649
                %v1651 = vld [vmem:[%s1585 + $0x100] sm:$0xff]
                %1652 = vst [vmem:[%s1586 + $0x100] sm:$0xff] %v1651
                %v1653 = vld [vmem:[%s1585 + $0x108] sm:$0xff]
                %1654 = vst [vmem:[%s1586 + $0x108] sm:$0xff] %v1653
                %v1655 = vld [vmem:[%s1585 + $0x110] sm:$0xff]
                %1656 = vst [vmem:[%s1586 + $0x110] sm:$0xff] %v1655
                %v1657 = vld [vmem:[%s1585 + $0x118] sm:$0xff]
                %1658 = vst [vmem:[%s1586 + $0x118] sm:$0xff] %v1657
                %v1659 = vld [vmem:[%s1585 + $0x120] sm:$0xff]
                %1660 = vst [vmem:[%s1586 + $0x120] sm:$0xff] %v1659
                %v1661 = vld [vmem:[%s1585 + $0x128] sm:$0xff]
                %1662 = vst [vmem:[%s1586 + $0x128] sm:$0xff] %v1661
                %v1663 = vld [vmem:[%s1585 + $0x130] sm:$0xff]
                %1664 = vst [vmem:[%s1586 + $0x130] sm:$0xff] %v1663
                %v1665 = vld [vmem:[%s1585 + $0x138] sm:$0xff]
                %1666 = vst [vmem:[%s1586 + $0x138] sm:$0xff] %v1665
                %v1667 = vld [vmem:[%s1585 + $0x140] sm:$0xff]
                %1668 = vst [vmem:[%s1586 + $0x140] sm:$0xff] %v1667
                %v1669 = vld [vmem:[%s1585 + $0x148] sm:$0xff]
                %1670 = vst [vmem:[%s1586 + $0x148] sm:$0xff] %v1669
                %v1671 = vld [vmem:[%s1585 + $0x150] sm:$0xff]
                %1672 = vst [vmem:[%s1586 + $0x150] sm:$0xff] %v1671
                %v1673 = vld [vmem:[%s1585 + $0x158] sm:$0xff]
                %1674 = vst [vmem:[%s1586 + $0x158] sm:$0xff] %v1673
                %v1675 = vld [vmem:[%s1585 + $0x160] sm:$0xff]
                %1676 = vst [vmem:[%s1586 + $0x160] sm:$0xff] %v1675
                %v1677 = vld [vmem:[%s1585 + $0x168] sm:$0xff]
                %1678 = vst [vmem:[%s1586 + $0x168] sm:$0xff] %v1677
                %v1679 = vld [vmem:[%s1585 + $0x170] sm:$0xff]
                %1680 = vst [vmem:[%s1586 + $0x170] sm:$0xff] %v1679
                %v1681 = vld [vmem:[%s1585 + $0x178] sm:$0xff]
                %1682 = vst [vmem:[%s1586 + $0x178] sm:$0xff] %v1681
                %v1683 = vld [vmem:[%s1585 + $0x180] sm:$0xff]
                %1684 = vst [vmem:[%s1586 + $0x180] sm:$0xff] %v1683
                %v1685 = vld [vmem:[%s1585 + $0x188] sm:$0xff]
                %1686 = vst [vmem:[%s1586 + $0x188] sm:$0xff] %v1685
                %v1687 = vld [vmem:[%s1585 + $0x190] sm:$0xff]
                %1688 = vst [vmem:[%s1586 + $0x190] sm:$0xff] %v1687
                %v1689 = vld [vmem:[%s1585 + $0x198] sm:$0xff]
                %1690 = vst [vmem:[%s1586 + $0x198] sm:$0xff] %v1689
                %v1691 = vld [vmem:[%s1585 + $0x1a0] sm:$0xff]
                %1692 = vst [vmem:[%s1586 + $0x1a0] sm:$0xff] %v1691
                %v1693 = vld [vmem:[%s1585 + $0x1a8] sm:$0xff]
                %1694 = vst [vmem:[%s1586 + $0x1a8] sm:$0xff] %v1693
                %v1695 = vld [vmem:[%s1585 + $0x1b0] sm:$0xff]
                %1696 = vst [vmem:[%s1586 + $0x1b0] sm:$0xff] %v1695
                %v1697 = vld [vmem:[%s1585 + $0x1b8] sm:$0xff]
                %1698 = vst [vmem:[%s1586 + $0x1b8] sm:$0xff] %v1697
                %v1699 = vld [vmem:[%s1585 + $0x1c0] sm:$0xff]
                %1700 = vst [vmem:[%s1586 + $0x1c0] sm:$0xff] %v1699
                %v1701 = vld [vmem:[%s1585 + $0x1c8] sm:$0xff]
                %1702 = vst [vmem:[%s1586 + $0x1c8] sm:$0xff] %v1701
                %v1703 = vld [vmem:[%s1585 + $0x1d0] sm:$0xff]
                %1704 = vst [vmem:[%s1586 + $0x1d0] sm:$0xff] %v1703
                %v1705 = vld [vmem:[%s1585 + $0x1d8] sm:$0xff]
                %1706 = vst [vmem:[%s1586 + $0x1d8] sm:$0xff] %v1705
                %v1707 = vld [vmem:[%s1585 + $0x1e0] sm:$0xff]
                %1708 = vst [vmem:[%s1586 + $0x1e0] sm:$0xff] %v1707
                %v1709 = vld [vmem:[%s1585 + $0x1e8] sm:$0xff]
                %1710 = vst [vmem:[%s1586 + $0x1e8] sm:$0xff] %v1709
                %v1711 = vld [vmem:[%s1585 + $0x1f0] sm:$0xff]
                %1712 = vst [vmem:[%s1586 + $0x1f0] sm:$0xff] %v1711
                %v1713 = vld [vmem:[%s1585 + $0x1f8] sm:$0xff]
                %1714 = vst [vmem:[%s1586 + $0x1f8] sm:$0xff] %v1713
                %s1715 = sadd.s32 1, %s1584
                %p1716 = scmp.ge.s32.totalorder %s1715, %s1577
                %s1717 = scalar_select %p1716, 0, %s1715
                %s1718 = smul.u32 %s1717, 512
                %s1719 = smul.u32 %s1717, 512
                %s1720 = scalar_lea.vmem %s1557, %s1718 [#allocation2]
                %s1721 = scalar_lea.vmem %s1568, %s1719
              $region53: #{tpu_custom_call.1} parent=47 // loop_footer
                %s1581 = sadd.s32 %s1579, 1
              $region54: #{tpu_custom_call.1} parent=47 // loop_footer_branch
                %1578 = sbr.rel target = $region50
              $region55: #{tpu_custom_call.1} parent=47 // loop_exit
                _
              %s1722 = sshrl.u32 %s1564, 6
              %s1723 = sand.u32 %s1564, 63
              %s1724 = smul.u32 %s1722, 64
              %s1725 = smul.u32 8, %s1724
              %s1726 = scalar_lea.vmem %s1557, %s1725 [#allocation2]
              %s1727 = smul.u32 8, %s1724
              %s1728 = scalar_lea.vmem %s1568, %s1727
              // While loop
              $region56: #{tpu_custom_call.1} parent=47 // loop_pre_header
                _
              $region57: #{tpu_custom_call.1} parent=47 // loop_header
                %s1730 = sphi 0, %s1732
                %p1731 = scmp.ge.s32.totalorder %s1730, %s1723
                %s1735 = sphi 0, %s1742
                %s1736 = sphi %s1726, %s1745
                %s1737 = sphi %s1728, %s1746
              $region58: #{tpu_custom_call.1} parent=47 // loop_header_branch
                %1734 = sbr.rel (%p1731) target = $region62
              $region59: #{tpu_custom_call.1} parent=47 // loop_body
                %v1738 = vld [vmem:[%s1736] sm:$0xff]
                %1739 = vst [vmem:[%s1737] sm:$0xff] %v1738
                %s1740 = sadd.s32 1, %s1735
                %p1741 = scmp.ge.s32.totalorder %s1740, %s1723
                %s1742 = scalar_select %p1741, 0, %s1740
                %s1743 = smul.u32 %s1742, 8
                %s1744 = smul.u32 %s1742, 8
                %s1745 = scalar_lea.vmem %s1726, %s1743 [#allocation2]
                %s1746 = scalar_lea.vmem %s1728, %s1744
              $region60: #{tpu_custom_call.1} parent=47 // loop_footer
                %s1732 = sadd.s32 %s1730, 1
              $region61: #{tpu_custom_call.1} parent=47 // loop_footer_branch
                %1729 = sbr.rel target = $region57
              $region62: #{tpu_custom_call.1} parent=47 // loop_exit
                _
            $region48: #{tpu_custom_call.1} parent=39 // pred_fallthru
              _
          $region40: #{tpu_custom_call.1} parent=35 // pred_fallthru
            _
          %1921 = vnop
        $region36: #{tpu_custom_call.1} parent=31 // pred_fallthru
          _
      $region32: #{tpu_custom_call.1} parent=5 // pred_fallthru
        _
      %p1922 = scmp.le.s32.totalorder 2, %s9
      // Predicated region
      $region85: #{tpu_custom_call.1} parent=5 // pred_check
        %p1923 = pneg %p1922
      $region86: #{tpu_custom_call.1} parent=5 // pred_check_branch
        %1925 = sbr.rel (%p1923) target = $region88
      $region87: #{tpu_custom_call.1} parent=5 // pred_region
        %s1926 = ssub.s32 %s9, 2
        // Predicated region
        $region89: #{tpu_custom_call.1} parent=87 // pred_check
          %p1927 = pneg %p106
        $region90: #{tpu_custom_call.1} parent=87 // pred_check_branch
          %1929 = sbr.rel (%p1927) target = $region92
        $region91: #{tpu_custom_call.1} parent=87 // pred_region
          %s1930 = sand.u32 %s91, 1
          %s1931 = sand.u32 %s91, 1
          %s1932 = smul.addr %s1931, 1024
          %s1933 = scalar_lea.vmem [#allocation2], %s1932
        $region92: #{tpu_custom_call.1} parent=87 // pred_fallthru
          _
      $region88: #{tpu_custom_call.1} parent=5 // pred_fallthru
        _
    $region6: #{tpu_custom_call.1} parent=1 // loop_footer
      %s13 = sadd.s32 1, %s9
    $region7: #{tpu_custom_call.1} parent=1 // loop_footer_branch
      %8 = sbr.rel target = $region3
    $region8: #{tpu_custom_call.1} parent=1 // loop_exit
      _

</llo_original>
